<compile_context>
chip_gen: v7x
topology: tpu7x:2x2x1
jax: 0.10.0
libtpu: 0.0.40
codegen_flags: <defaults>
</compile_context>

<pallas_src>
import functools

import jax
import jax.numpy as jnp
from jax.experimental import pallas as pl
from jax.experimental.pallas import tpu as pltpu


def _layer_norm_f32(v, g_ref, b_ref, eps=1e-5):
    mu = jnp.mean(v, axis=-1, keepdims=True)
    d = v - mu
    var = jnp.mean(d * d, axis=-1, keepdims=True)
    return d * jax.lax.rsqrt(var + eps) * g_ref[...].astype(jnp.float32) \
        + b_ref[...].astype(jnp.float32)


def _prompt_encoder_kernel(x_ref,
                           g1_ref, b1_ref, w_in_ref, b_in_ref,
                           w_out_ref, b_out_ref,
                           g2_ref, b2_ref, w_fc_ref, b_fc_ref,
                           w_pr_ref, b_pr_ref, gf_ref, bf_ref,
                           out_ref, *, num_heads):
    _, K, C = x_ref.shape
    H = num_heads
    Dh = C // H
    scale = 1.0 / float(Dh) ** 0.5
    cdt = w_in_ref.dtype                      # MXU operand dtype (bf16-ready)

    x = x_ref[0].astype(jnp.float32)          # (K, C), residual stream in f32

    # ---- residual attention block: x = x + out_proj(MHA(LN1(x))) ----------
    h = _layer_norm_f32(x, g1_ref, b1_ref)
    qkv = jnp.dot(h.astype(cdt), w_in_ref[...],
                  preferred_element_type=jnp.float32)           # (K, 3C)
    qkv = qkv + b_in_ref[...].astype(jnp.float32)
    q = qkv[:, 0 * C:1 * C] * scale           # fold 1/sqrt(Dh) into q once
    k = qkv[:, 1 * C:2 * C]
    v = qkv[:, 2 * C:3 * C]

    attn_acc = None
    for hh in range(H):                        # H is small & static: unrolled
        sl = slice(hh * Dh, (hh + 1) * Dh)
        q_h = q[:, sl].astype(cdt)             # (K, Dh)
        k_h = k[:, sl].astype(cdt)
        v_h = v[:, sl].astype(cdt)
        s = jax.lax.dot_general(q_h, k_h, (((1,), (1,)), ((), ())),
                                preferred_element_type=jnp.float32)  # (K, K)
        s = s - jnp.max(s, axis=-1, keepdims=True)
        p = jnp.exp(s)
        p = p / jnp.sum(p, axis=-1, keepdims=True)
        o_h = jnp.dot(p.astype(cdt), v_h,
                      preferred_element_type=jnp.float32)            # (K, Dh)
        # Per-head partial out_proj == concat(o_h) @ W_out, without a concat.
        part = jnp.dot(o_h.astype(cdt), w_out_ref[sl, :],
                       preferred_element_type=jnp.float32)           # (K, C)
        attn_acc = part if attn_acc is None else attn_acc + part
    x = x + attn_acc + b_out_ref[...].astype(jnp.float32)

    # ---- residual MLP block: x = x + c_proj(QuickGELU(c_fc(LN2(x)))) ------
    h2 = _layer_norm_f32(x, g2_ref, b2_ref)
    m = jnp.dot(h2.astype(cdt), w_fc_ref[...],
                preferred_element_type=jnp.float32) \
        + b_fc_ref[...].astype(jnp.float32)                          # (K, 4C)
    m = m * (1.0 / (1.0 + jnp.exp(-1.702 * m)))                      # QuickGELU
    m = jnp.dot(m.astype(cdt), w_pr_ref[...],
                preferred_element_type=jnp.float32) \
        + b_pr_ref[...].astype(jnp.float32)                          # (K, C)
    x = x + m

    # ---- ln_final ----------------------------------------------------------
    out_ref[0] = _layer_norm_f32(x, gf_ref, bf_ref).astype(out_ref.dtype)


def prompt_encoder_without_posemb(prompt_emb, params, *, num_heads,
                                  embed_dim=None):
    """prompt_emb: (B, K, C).  Weights are pre-transposed for row-major matmul:
       w_in_t (C,3C)+b_in(3C,)  packed q/k/v in_proj
       w_out_t (C,C)+b_out(C,)  attention out_proj
       w_fc_t (C,4C)+b_fc(4C,)  mlp.c_fc ; w_pr_t (4C,C)+b_pr(C,) mlp.c_proj
       g1/b1, g2/b2, gf/bf      LayerNorm affines (C,)
    """
    B, K, C = prompt_emb.shape
    if embed_dim is None:
        embed_dim = C
    # TODO(synk): the PyTorch reshape(B, K, embed_dim) is only valid when
    # embed_dim == transformer_width (text_projection is never applied).
    assert embed_dim == C, "reshape(B, K, embed_dim) requires embed_dim == width"

    def as2d(a):
        return a.reshape(1, -1) if a.ndim == 1 else a

    weights = [as2d(params[name]) for name in (
        "g1", "b1", "w_in_t", "b_in", "w_out_t", "b_out",
        "g2", "b2", "w_fc_t", "b_fc", "w_pr_t", "b_pr", "gf", "bf")]

    in_specs = [pl.BlockSpec((1, K, C), lambda b: (b, 0, 0))]
    in_specs += [pl.BlockSpec(w.shape, lambda b: (0, 0)) for w in weights]

    kernel = functools.partial(_prompt_encoder_kernel, num_heads=num_heads)
    return pl.pallas_call(
        kernel,
        out_shape=jax.ShapeDtypeStruct((B, K, embed_dim), prompt_emb.dtype),
        grid_spec=pltpu.PrefetchScalarGridSpec(
            num_scalar_prefetch=0,
            grid=(B,),
            in_specs=in_specs,
            out_specs=pl.BlockSpec((1, K, embed_dim), lambda b: (b, 0, 0)),
        ),
        compiler_params=pltpu.CompilerParams(
            dimension_semantics=("parallel",),
            vmem_limit_bytes=32 * 1024 * 1024,
        ),
    )(prompt_emb, *weights)


def prompt_encoder_ref(prompt_emb, params, *, num_heads):
    """Pure-JAX reference mirroring the PyTorch forward (f32)."""
    x = prompt_emb.astype(jnp.float32)
    B, K, C = x.shape
    H = num_heads
    Dh = C // H
    scale = 1.0 / float(Dh) ** 0.5
    w = {kk: vv.astype(jnp.float32) for kk, vv in params.items()}

    def ln(v, g, b, eps=1e-5):
        mu = jnp.mean(v, axis=-1, keepdims=True)
        d = v - mu
        var = jnp.mean(d * d, axis=-1, keepdims=True)
        return d * jax.lax.rsqrt(var + eps) * g + b

    h = ln(x, w["g1"], w["b1"])
    qkv = h @ w["w_in_t"] + w["b_in"]
    q, k, v = jnp.split(qkv, 3, axis=-1)
    q = q * scale
    qh = q.reshape(B, K, H, Dh)
    kh = k.reshape(B, K, H, Dh)
    vh = v.reshape(B, K, H, Dh)
    s = jnp.einsum("bkhd,bmhd->bhkm", qh, kh)
    a = jax.nn.softmax(s, axis=-1)
    o = jnp.einsum("bhkm,bmhd->bkhd", a, vh).reshape(B, K, C)
    x = x + o @ w["w_out_t"] + w["b_out"]
    h2 = ln(x, w["g2"], w["b2"])
    m = h2 @ w["w_fc_t"] + w["b_fc"]
    m = m * (1.0 / (1.0 + jnp.exp(-1.702 * m)))
    x = x + m @ w["w_pr_t"] + w["b_pr"]
    return ln(x, w["gf"], w["bf"])


if __name__ == "__main__":
    # Small shapes consistent with the module: batch=2, prompt_num=8,
    # transformer_width=128 (lane-dense), heads=4, layers=1, embed_dim=128.
    B, K, C, H = 2, 8, 128, 4
    EMBED = C

    key = jax.random.PRNGKey(0)
    ks = jax.random.split(key, 16)

    def nrm(k_, shape, s):
        return (s * jax.random.normal(k_, shape)).astype(jnp.float32)

    prompt_emb = nrm(ks[0], (B, K, C), 1.0)

    params = {
        "g1": 1.0 + nrm(ks[1], (C,), 0.1), "b1": nrm(ks[2], (C,), 0.1),
        "w_in_t": nrm(ks[3], (C, 3 * C), 0.02), "b_in": nrm(ks[4], (3 * C,), 0.02),
        "w_out_t": nrm(ks[5], (C, C), 0.02), "b_out": nrm(ks[6], (C,), 0.02),
        "g2": 1.0 + nrm(ks[7], (C,), 0.1), "b2": nrm(ks[8], (C,), 0.1),
        "w_fc_t": nrm(ks[9], (C, 4 * C), 0.02), "b_fc": nrm(ks[10], (4 * C,), 0.02),
        "w_pr_t": nrm(ks[11], (4 * C, C), 0.02), "b_pr": nrm(ks[12], (C,), 0.02),
        "gf": 1.0 + nrm(ks[13], (C,), 0.1), "bf": nrm(ks[14], (C,), 0.1),
    }

    out = prompt_encoder_without_posemb(prompt_emb, params, num_heads=H,
                                        embed_dim=EMBED)
    jax.block_until_ready(out)

    ref = prompt_encoder_ref(prompt_emb, params, num_heads=H)
    assert out.shape == (B, K, EMBED)
    err = float(jnp.max(jnp.abs(out.astype(jnp.float32) - ref)))
    assert err < 2e-2, f"max abs err {err}"
    print("KERNEL_OK")
</pallas_src>

<mosaic_0001>
module attributes {stable_mosaic.version = 11 : i64} {
  func.func @_prompt_encoder_kernel(%arg0: i32, %arg1: memref<1x8x128xf32, #tpu.memory_space<vmem>>, %arg2: memref<1x128xf32, #tpu.memory_space<vmem>>, %arg3: memref<1x128xf32, #tpu.memory_space<vmem>>, %arg4: memref<128x384xf32, #tpu.memory_space<vmem>>, %arg5: memref<1x384xf32, #tpu.memory_space<vmem>>, %arg6: memref<128x128xf32, #tpu.memory_space<vmem>>, %arg7: memref<1x128xf32, #tpu.memory_space<vmem>>, %arg8: memref<1x128xf32, #tpu.memory_space<vmem>>, %arg9: memref<1x128xf32, #tpu.memory_space<vmem>>, %arg10: memref<128x512xf32, #tpu.memory_space<vmem>>, %arg11: memref<1x512xf32, #tpu.memory_space<vmem>>, %arg12: memref<512x128xf32, #tpu.memory_space<vmem>>, %arg13: memref<1x128xf32, #tpu.memory_space<vmem>>, %arg14: memref<1x128xf32, #tpu.memory_space<vmem>>, %arg15: memref<1x128xf32, #tpu.memory_space<vmem>>, %arg16: memref<1x8x128xf32, #tpu.memory_space<vmem>>) attributes {dimension_semantics = [#tpu.dimension_semantics<parallel>], iteration_bounds = array<i64: 2>, scalar_prefetch = 0 : i64, scratch_operands = 0 : i64, tpu.core_type = #tpu.core_type<tc>, window_params = [{transform_indices = @transform_0, window_bounds = array<i64: 1, 8, 128>}, {pipeline_mode = #tpu.pipeline_mode<synchronous>, transform_indices = @transform_1, window_bounds = array<i64: 1, 128>}, {pipeline_mode = #tpu.pipeline_mode<synchronous>, transform_indices = @transform_2, window_bounds = array<i64: 1, 128>}, {pipeline_mode = #tpu.pipeline_mode<synchronous>, transform_indices = @transform_3, window_bounds = array<i64: 128, 384>}, {pipeline_mode = #tpu.pipeline_mode<synchronous>, transform_indices = @transform_4, window_bounds = array<i64: 1, 384>}, {pipeline_mode = #tpu.pipeline_mode<synchronous>, transform_indices = @transform_5, window_bounds = array<i64: 128, 128>}, {pipeline_mode = #tpu.pipeline_mode<synchronous>, transform_indices = @transform_6, window_bounds = array<i64: 1, 128>}, {pipeline_mode = #tpu.pipeline_mode<synchronous>, transform_indices = @transform_7, window_bounds = array<i64: 1, 128>}, {pipeline_mode = #tpu.pipeline_mode<synchronous>, transform_indices = @transform_8, window_bounds = array<i64: 1, 128>}, {pipeline_mode = #tpu.pipeline_mode<synchronous>, transform_indices = @transform_9, window_bounds = array<i64: 128, 512>}, {pipeline_mode = #tpu.pipeline_mode<synchronous>, transform_indices = @transform_10, window_bounds = array<i64: 1, 512>}, {pipeline_mode = #tpu.pipeline_mode<synchronous>, transform_indices = @transform_11, window_bounds = array<i64: 512, 128>}, {pipeline_mode = #tpu.pipeline_mode<synchronous>, transform_indices = @transform_12, window_bounds = array<i64: 1, 128>}, {pipeline_mode = #tpu.pipeline_mode<synchronous>, transform_indices = @transform_13, window_bounds = array<i64: 1, 128>}, {pipeline_mode = #tpu.pipeline_mode<synchronous>, transform_indices = @transform_14, window_bounds = array<i64: 1, 128>}, {transform_indices = @transform_15, window_bounds = array<i64: 1, 8, 128>}]} {
    %c0 = arith.constant 0 : index
    %c0_0 = arith.constant 0 : index
    %c0_1 = arith.constant 0 : index
    %0 = vector.load %arg1[%c0, %c0_0, %c0_1] : memref<1x8x128xf32, #tpu.memory_space<vmem>>, vector<1x8x128xf32>
    %1 = vector.shape_cast %0 : vector<1x8x128xf32> to vector<8x128xf32>
    %cst = arith.constant dense<0.000000e+00> : vector<8xf32>
    %2 = vector.multi_reduction <add>, %1, %cst [1] : vector<8x128xf32> to vector<8xf32>
    %3 = vector.shape_cast %2 : vector<8xf32> to vector<8x1xf32>
    %cst_2 = arith.constant 1.280000e+02 : f32
    %4 = vector.broadcast %cst_2 : f32 to vector<8x1xf32>
    %5 = arith.divf %3, %4 : vector<8x1xf32>
    %6 = vector.broadcast %5 : vector<8x1xf32> to vector<8x128xf32>
    %7 = arith.subf %1, %6 : vector<8x128xf32>
    %8 = arith.mulf %7, %7 : vector<8x128xf32>
    %cst_3 = arith.constant dense<0.000000e+00> : vector<8xf32>
    %9 = vector.multi_reduction <add>, %8, %cst_3 [1] : vector<8x128xf32> to vector<8xf32>
    %10 = vector.shape_cast %9 : vector<8xf32> to vector<8x1xf32>
    %cst_4 = arith.constant 1.280000e+02 : f32
    %11 = vector.broadcast %cst_4 : f32 to vector<8x1xf32>
    %12 = arith.divf %10, %11 : vector<8x1xf32>
    %cst_5 = arith.constant 9.99999974E-6 : f32
    %13 = vector.broadcast %cst_5 : f32 to vector<8x1xf32>
    %14 = arith.addf %12, %13 : vector<8x1xf32>
    %15 = math.rsqrt %14 : vector<8x1xf32>
    %16 = vector.broadcast %15 : vector<8x1xf32> to vector<8x128xf32>
    %17 = arith.mulf %7, %16 : vector<8x128xf32>
    %c0_6 = arith.constant 0 : index
    %c0_7 = arith.constant 0 : index
    %18 = vector.load %arg2[%c0_6, %c0_7] : memref<1x128xf32, #tpu.memory_space<vmem>>, vector<1x128xf32>
    %19 = vector.broadcast %18 : vector<1x128xf32> to vector<8x128xf32>
    %20 = arith.mulf %17, %19 : vector<8x128xf32>
    %c0_8 = arith.constant 0 : index
    %c0_9 = arith.constant 0 : index
    %21 = vector.load %arg3[%c0_8, %c0_9] : memref<1x128xf32, #tpu.memory_space<vmem>>, vector<1x128xf32>
    %22 = vector.broadcast %21 : vector<1x128xf32> to vector<8x128xf32>
    %23 = arith.addf %20, %22 : vector<8x128xf32>
    %c0_10 = arith.constant 0 : index
    %c0_11 = arith.constant 0 : index
    %24 = vector.load %arg4[%c0_10, %c0_11] : memref<128x384xf32, #tpu.memory_space<vmem>>, vector<128x384xf32>
    %cst_12 = arith.constant dense<0.000000e+00> : vector<8x384xf32>
    %25 = tpu.matmul %23, %24, %cst_12 {dimension_numbers = #tpu.dot_dimension_numbers<[1], [0], [0], [1], [0, 0, 1, 1], [], []>} : vector<8x128xf32>, vector<128x384xf32>, vector<8x384xf32> -> vector<8x384xf32>
    %c0_13 = arith.constant 0 : index
    %c0_14 = arith.constant 0 : index
    %26 = vector.load %arg5[%c0_13, %c0_14] : memref<1x384xf32, #tpu.memory_space<vmem>>, vector<1x384xf32>
    %27 = vector.broadcast %26 : vector<1x384xf32> to vector<8x384xf32>
    %28 = arith.addf %25, %27 : vector<8x384xf32>
    %29 = vector.extract_strided_slice %28 {offsets = [0, 0], sizes = [8, 128], strides = [1, 1]} : vector<8x384xf32> to vector<8x128xf32>
    %cst_15 = arith.constant 0.176776692 : f32
    %30 = vector.broadcast %cst_15 : f32 to vector<8x128xf32>
    %31 = arith.mulf %29, %30 : vector<8x128xf32>
    %32 = vector.extract_strided_slice %28 {offsets = [0, 128], sizes = [8, 128], strides = [1, 1]} : vector<8x384xf32> to vector<8x128xf32>
    %33 = vector.extract_strided_slice %28 {offsets = [0, 256], sizes = [8, 128], strides = [1, 1]} : vector<8x384xf32> to vector<8x128xf32>
    %34 = vector.extract_strided_slice %31 {offsets = [0, 0], sizes = [8, 32], strides = [1, 1]} : vector<8x128xf32> to vector<8x32xf32>
    %35 = vector.extract_strided_slice %32 {offsets = [0, 0], sizes = [8, 32], strides = [1, 1]} : vector<8x128xf32> to vector<8x32xf32>
    %36 = vector.extract_strided_slice %33 {offsets = [0, 0], sizes = [8, 32], strides = [1, 1]} : vector<8x128xf32> to vector<8x32xf32>
    %cst_16 = arith.constant dense<0.000000e+00> : vector<8x8xf32>
    %37 = tpu.matmul %34, %35, %cst_16 {dimension_numbers = #tpu.dot_dimension_numbers<[1], [1], [0], [0], [0, 0, 1, 0], [], []>} : vector<8x32xf32>, vector<8x32xf32>, vector<8x8xf32> -> vector<8x8xf32>
    %cst_17 = arith.constant dense<0xFF800000> : vector<8xf32>
    %38 = vector.multi_reduction <maximumf>, %37, %cst_17 [1] : vector<8x8xf32> to vector<8xf32>
    %39 = vector.shape_cast %38 : vector<8xf32> to vector<8x1xf32>
    %40 = vector.broadcast %39 : vector<8x1xf32> to vector<8x8xf32>
    %41 = arith.subf %37, %40 : vector<8x8xf32>
    %42 = math.exp %41 : vector<8x8xf32>
    %cst_18 = arith.constant dense<0.000000e+00> : vector<8xf32>
    %43 = vector.multi_reduction <add>, %42, %cst_18 [1] : vector<8x8xf32> to vector<8xf32>
    %44 = vector.shape_cast %43 : vector<8xf32> to vector<8x1xf32>
    %45 = vector.broadcast %44 : vector<8x1xf32> to vector<8x8xf32>
    %46 = arith.divf %42, %45 : vector<8x8xf32>
    %cst_19 = arith.constant dense<0.000000e+00> : vector<8x32xf32>
    %47 = tpu.matmul %46, %36, %cst_19 {dimension_numbers = #tpu.dot_dimension_numbers<[1], [0], [0], [1], [0, 0, 1, 1], [], []>} : vector<8x8xf32>, vector<8x32xf32>, vector<8x32xf32> -> vector<8x32xf32>
    %c0_20 = arith.constant 0 : index
    %c0_21 = arith.constant 0 : index
    %48 = vector.load %arg6[%c0_20, %c0_21] : memref<128x128xf32, #tpu.memory_space<vmem>>, vector<32x128xf32>
    %cst_22 = arith.constant dense<0.000000e+00> : vector<8x128xf32>
    %49 = tpu.matmul %47, %48, %cst_22 {dimension_numbers = #tpu.dot_dimension_numbers<[1], [0], [0], [1], [0, 0, 1, 1], [], []>} : vector<8x32xf32>, vector<32x128xf32>, vector<8x128xf32> -> vector<8x128xf32>
    %50 = vector.extract_strided_slice %31 {offsets = [0, 32], sizes = [8, 32], strides = [1, 1]} : vector<8x128xf32> to vector<8x32xf32>
    %51 = vector.extract_strided_slice %32 {offsets = [0, 32], sizes = [8, 32], strides = [1, 1]} : vector<8x128xf32> to vector<8x32xf32>
    %52 = vector.extract_strided_slice %33 {offsets = [0, 32], sizes = [8, 32], strides = [1, 1]} : vector<8x128xf32> to vector<8x32xf32>
    %cst_23 = arith.constant dense<0.000000e+00> : vector<8x8xf32>
    %53 = tpu.matmul %50, %51, %cst_23 {dimension_numbers = #tpu.dot_dimension_numbers<[1], [1], [0], [0], [0, 0, 1, 0], [], []>} : vector<8x32xf32>, vector<8x32xf32>, vector<8x8xf32> -> vector<8x8xf32>
    %cst_24 = arith.constant dense<0xFF800000> : vector<8xf32>
    %54 = vector.multi_reduction <maximumf>, %53, %cst_24 [1] : vector<8x8xf32> to vector<8xf32>
    %55 = vector.shape_cast %54 : vector<8xf32> to vector<8x1xf32>
    %56 = vector.broadcast %55 : vector<8x1xf32> to vector<8x8xf32>
    %57 = arith.subf %53, %56 : vector<8x8xf32>
    %58 = math.exp %57 : vector<8x8xf32>
    %cst_25 = arith.constant dense<0.000000e+00> : vector<8xf32>
    %59 = vector.multi_reduction <add>, %58, %cst_25 [1] : vector<8x8xf32> to vector<8xf32>
    %60 = vector.shape_cast %59 : vector<8xf32> to vector<8x1xf32>
    %61 = vector.broadcast %60 : vector<8x1xf32> to vector<8x8xf32>
    %62 = arith.divf %58, %61 : vector<8x8xf32>
    %cst_26 = arith.constant dense<0.000000e+00> : vector<8x32xf32>
    %63 = tpu.matmul %62, %52, %cst_26 {dimension_numbers = #tpu.dot_dimension_numbers<[1], [0], [0], [1], [0, 0, 1, 1], [], []>} : vector<8x8xf32>, vector<8x32xf32>, vector<8x32xf32> -> vector<8x32xf32>
    %c32 = arith.constant 32 : index
    %c0_27 = arith.constant 0 : index
    %64 = vector.load %arg6[%c32, %c0_27] : memref<128x128xf32, #tpu.memory_space<vmem>>, vector<32x128xf32>
    %cst_28 = arith.constant dense<0.000000e+00> : vector<8x128xf32>
    %65 = tpu.matmul %63, %64, %cst_28 {dimension_numbers = #tpu.dot_dimension_numbers<[1], [0], [0], [1], [0, 0, 1, 1], [], []>} : vector<8x32xf32>, vector<32x128xf32>, vector<8x128xf32> -> vector<8x128xf32>
    %66 = arith.addf %49, %65 : vector<8x128xf32>
    %67 = vector.extract_strided_slice %31 {offsets = [0, 64], sizes = [8, 32], strides = [1, 1]} : vector<8x128xf32> to vector<8x32xf32>
    %68 = vector.extract_strided_slice %32 {offsets = [0, 64], sizes = [8, 32], strides = [1, 1]} : vector<8x128xf32> to vector<8x32xf32>
    %69 = vector.extract_strided_slice %33 {offsets = [0, 64], sizes = [8, 32], strides = [1, 1]} : vector<8x128xf32> to vector<8x32xf32>
    %cst_29 = arith.constant dense<0.000000e+00> : vector<8x8xf32>
    %70 = tpu.matmul %67, %68, %cst_29 {dimension_numbers = #tpu.dot_dimension_numbers<[1], [1], [0], [0], [0, 0, 1, 0], [], []>} : vector<8x32xf32>, vector<8x32xf32>, vector<8x8xf32> -> vector<8x8xf32>
    %cst_30 = arith.constant dense<0xFF800000> : vector<8xf32>
    %71 = vector.multi_reduction <maximumf>, %70, %cst_30 [1] : vector<8x8xf32> to vector<8xf32>
    %72 = vector.shape_cast %71 : vector<8xf32> to vector<8x1xf32>
    %73 = vector.broadcast %72 : vector<8x1xf32> to vector<8x8xf32>
    %74 = arith.subf %70, %73 : vector<8x8xf32>
    %75 = math.exp %74 : vector<8x8xf32>
    %cst_31 = arith.constant dense<0.000000e+00> : vector<8xf32>
    %76 = vector.multi_reduction <add>, %75, %cst_31 [1] : vector<8x8xf32> to vector<8xf32>
    %77 = vector.shape_cast %76 : vector<8xf32> to vector<8x1xf32>
    %78 = vector.broadcast %77 : vector<8x1xf32> to vector<8x8xf32>
    %79 = arith.divf %75, %78 : vector<8x8xf32>
    %cst_32 = arith.constant dense<0.000000e+00> : vector<8x32xf32>
    %80 = tpu.matmul %79, %69, %cst_32 {dimension_numbers = #tpu.dot_dimension_numbers<[1], [0], [0], [1], [0, 0, 1, 1], [], []>} : vector<8x8xf32>, vector<8x32xf32>, vector<8x32xf32> -> vector<8x32xf32>
    %c64 = arith.constant 64 : index
    %c0_33 = arith.constant 0 : index
    %81 = vector.load %arg6[%c64, %c0_33] : memref<128x128xf32, #tpu.memory_space<vmem>>, vector<32x128xf32>
    %cst_34 = arith.constant dense<0.000000e+00> : vector<8x128xf32>
    %82 = tpu.matmul %80, %81, %cst_34 {dimension_numbers = #tpu.dot_dimension_numbers<[1], [0], [0], [1], [0, 0, 1, 1], [], []>} : vector<8x32xf32>, vector<32x128xf32>, vector<8x128xf32> -> vector<8x128xf32>
    %83 = arith.addf %66, %82 : vector<8x128xf32>
    %84 = vector.extract_strided_slice %31 {offsets = [0, 96], sizes = [8, 32], strides = [1, 1]} : vector<8x128xf32> to vector<8x32xf32>
    %85 = vector.extract_strided_slice %32 {offsets = [0, 96], sizes = [8, 32], strides = [1, 1]} : vector<8x128xf32> to vector<8x32xf32>
    %86 = vector.extract_strided_slice %33 {offsets = [0, 96], sizes = [8, 32], strides = [1, 1]} : vector<8x128xf32> to vector<8x32xf32>
    %cst_35 = arith.constant dense<0.000000e+00> : vector<8x8xf32>
    %87 = tpu.matmul %84, %85, %cst_35 {dimension_numbers = #tpu.dot_dimension_numbers<[1], [1], [0], [0], [0, 0, 1, 0], [], []>} : vector<8x32xf32>, vector<8x32xf32>, vector<8x8xf32> -> vector<8x8xf32>
    %cst_36 = arith.constant dense<0xFF800000> : vector<8xf32>
    %88 = vector.multi_reduction <maximumf>, %87, %cst_36 [1] : vector<8x8xf32> to vector<8xf32>
    %89 = vector.shape_cast %88 : vector<8xf32> to vector<8x1xf32>
    %90 = vector.broadcast %89 : vector<8x1xf32> to vector<8x8xf32>
    %91 = arith.subf %87, %90 : vector<8x8xf32>
    %92 = math.exp %91 : vector<8x8xf32>
    %cst_37 = arith.constant dense<0.000000e+00> : vector<8xf32>
    %93 = vector.multi_reduction <add>, %92, %cst_37 [1] : vector<8x8xf32> to vector<8xf32>
    %94 = vector.shape_cast %93 : vector<8xf32> to vector<8x1xf32>
    %95 = vector.broadcast %94 : vector<8x1xf32> to vector<8x8xf32>
    %96 = arith.divf %92, %95 : vector<8x8xf32>
    %cst_38 = arith.constant dense<0.000000e+00> : vector<8x32xf32>
    %97 = tpu.matmul %96, %86, %cst_38 {dimension_numbers = #tpu.dot_dimension_numbers<[1], [0], [0], [1], [0, 0, 1, 1], [], []>} : vector<8x8xf32>, vector<8x32xf32>, vector<8x32xf32> -> vector<8x32xf32>
    %c96 = arith.constant 96 : index
    %c0_39 = arith.constant 0 : index
    %98 = vector.load %arg6[%c96, %c0_39] : memref<128x128xf32, #tpu.memory_space<vmem>>, vector<32x128xf32>
    %cst_40 = arith.constant dense<0.000000e+00> : vector<8x128xf32>
    %99 = tpu.matmul %97, %98, %cst_40 {dimension_numbers = #tpu.dot_dimension_numbers<[1], [0], [0], [1], [0, 0, 1, 1], [], []>} : vector<8x32xf32>, vector<32x128xf32>, vector<8x128xf32> -> vector<8x128xf32>
    %100 = arith.addf %83, %99 : vector<8x128xf32>
    %101 = arith.addf %1, %100 : vector<8x128xf32>
    %c0_41 = arith.constant 0 : index
    %c0_42 = arith.constant 0 : index
    %102 = vector.load %arg7[%c0_41, %c0_42] : memref<1x128xf32, #tpu.memory_space<vmem>>, vector<1x128xf32>
    %103 = vector.broadcast %102 : vector<1x128xf32> to vector<8x128xf32>
    %104 = arith.addf %101, %103 : vector<8x128xf32>
    %cst_43 = arith.constant dense<0.000000e+00> : vector<8xf32>
    %105 = vector.multi_reduction <add>, %104, %cst_43 [1] : vector<8x128xf32> to vector<8xf32>
    %106 = vector.shape_cast %105 : vector<8xf32> to vector<8x1xf32>
    %cst_44 = arith.constant 1.280000e+02 : f32
    %107 = vector.broadcast %cst_44 : f32 to vector<8x1xf32>
    %108 = arith.divf %106, %107 : vector<8x1xf32>
    %109 = vector.broadcast %108 : vector<8x1xf32> to vector<8x128xf32>
    %110 = arith.subf %104, %109 : vector<8x128xf32>
    %111 = arith.mulf %110, %110 : vector<8x128xf32>
    %cst_45 = arith.constant dense<0.000000e+00> : vector<8xf32>
    %112 = vector.multi_reduction <add>, %111, %cst_45 [1] : vector<8x128xf32> to vector<8xf32>
    %113 = vector.shape_cast %112 : vector<8xf32> to vector<8x1xf32>
    %cst_46 = arith.constant 1.280000e+02 : f32
    %114 = vector.broadcast %cst_46 : f32 to vector<8x1xf32>
    %115 = arith.divf %113, %114 : vector<8x1xf32>
    %cst_47 = arith.constant 9.99999974E-6 : f32
    %116 = vector.broadcast %cst_47 : f32 to vector<8x1xf32>
    %117 = arith.addf %115, %116 : vector<8x1xf32>
    %118 = math.rsqrt %117 : vector<8x1xf32>
    %119 = vector.broadcast %118 : vector<8x1xf32> to vector<8x128xf32>
    %120 = arith.mulf %110, %119 : vector<8x128xf32>
    %c0_48 = arith.constant 0 : index
    %c0_49 = arith.constant 0 : index
    %121 = vector.load %arg8[%c0_48, %c0_49] : memref<1x128xf32, #tpu.memory_space<vmem>>, vector<1x128xf32>
    %122 = vector.broadcast %121 : vector<1x128xf32> to vector<8x128xf32>
    %123 = arith.mulf %120, %122 : vector<8x128xf32>
    %c0_50 = arith.constant 0 : index
    %c0_51 = arith.constant 0 : index
    %124 = vector.load %arg9[%c0_50, %c0_51] : memref<1x128xf32, #tpu.memory_space<vmem>>, vector<1x128xf32>
    %125 = vector.broadcast %124 : vector<1x128xf32> to vector<8x128xf32>
    %126 = arith.addf %123, %125 : vector<8x128xf32>
    %c0_52 = arith.constant 0 : index
    %c0_53 = arith.constant 0 : index
    %127 = vector.load %arg10[%c0_52, %c0_53] : memref<128x512xf32, #tpu.memory_space<vmem>>, vector<128x512xf32>
    %cst_54 = arith.constant dense<0.000000e+00> : vector<8x512xf32>
    %128 = tpu.matmul %126, %127, %cst_54 {dimension_numbers = #tpu.dot_dimension_numbers<[1], [0], [0], [1], [0, 0, 1, 1], [], []>} : vector<8x128xf32>, vector<128x512xf32>, vector<8x512xf32> -> vector<8x512xf32>
    %c0_55 = arith.constant 0 : index
    %c0_56 = arith.constant 0 : index
    %129 = vector.load %arg11[%c0_55, %c0_56] : memref<1x512xf32, #tpu.memory_space<vmem>>, vector<1x512xf32>
    %130 = vector.broadcast %129 : vector<1x512xf32> to vector<8x512xf32>
    %131 = arith.addf %128, %130 : vector<8x512xf32>
    %cst_57 = arith.constant -1.702000e+00 : f32
    %132 = vector.broadcast %cst_57 : f32 to vector<8x512xf32>
    %133 = arith.mulf %132, %131 : vector<8x512xf32>
    %134 = math.exp %133 : vector<8x512xf32>
    %cst_58 = arith.constant 1.000000e+00 : f32
    %135 = vector.broadcast %cst_58 : f32 to vector<8x512xf32>
    %136 = arith.addf %135, %134 : vector<8x512xf32>
    %cst_59 = arith.constant 1.000000e+00 : f32
    %137 = vector.broadcast %cst_59 : f32 to vector<8x512xf32>
    %138 = arith.divf %137, %136 : vector<8x512xf32>
    %139 = arith.mulf %131, %138 : vector<8x512xf32>
    %c0_60 = arith.constant 0 : index
    %c0_61 = arith.constant 0 : index
    %140 = vector.load %arg12[%c0_60, %c0_61] : memref<512x128xf32, #tpu.memory_space<vmem>>, vector<512x128xf32>
    %cst_62 = arith.constant dense<0.000000e+00> : vector<8x128xf32>
    %141 = tpu.matmul %139, %140, %cst_62 {dimension_numbers = #tpu.dot_dimension_numbers<[1], [0], [0], [1], [0, 0, 1, 1], [], []>} : vector<8x512xf32>, vector<512x128xf32>, vector<8x128xf32> -> vector<8x128xf32>
    %c0_63 = arith.constant 0 : index
    %c0_64 = arith.constant 0 : index
    %142 = vector.load %arg13[%c0_63, %c0_64] : memref<1x128xf32, #tpu.memory_space<vmem>>, vector<1x128xf32>
    %143 = vector.broadcast %142 : vector<1x128xf32> to vector<8x128xf32>
    %144 = arith.addf %141, %143 : vector<8x128xf32>
    %145 = arith.addf %104, %144 : vector<8x128xf32>
    %cst_65 = arith.constant dense<0.000000e+00> : vector<8xf32>
    %146 = vector.multi_reduction <add>, %145, %cst_65 [1] : vector<8x128xf32> to vector<8xf32>
    %147 = vector.shape_cast %146 : vector<8xf32> to vector<8x1xf32>
    %cst_66 = arith.constant 1.280000e+02 : f32
    %148 = vector.broadcast %cst_66 : f32 to vector<8x1xf32>
    %149 = arith.divf %147, %148 : vector<8x1xf32>
    %150 = vector.broadcast %149 : vector<8x1xf32> to vector<8x128xf32>
    %151 = arith.subf %145, %150 : vector<8x128xf32>
    %152 = arith.mulf %151, %151 : vector<8x128xf32>
    %cst_67 = arith.constant dense<0.000000e+00> : vector<8xf32>
    %153 = vector.multi_reduction <add>, %152, %cst_67 [1] : vector<8x128xf32> to vector<8xf32>
    %154 = vector.shape_cast %153 : vector<8xf32> to vector<8x1xf32>
    %cst_68 = arith.constant 1.280000e+02 : f32
    %155 = vector.broadcast %cst_68 : f32 to vector<8x1xf32>
    %156 = arith.divf %154, %155 : vector<8x1xf32>
    %cst_69 = arith.constant 9.99999974E-6 : f32
    %157 = vector.broadcast %cst_69 : f32 to vector<8x1xf32>
    %158 = arith.addf %156, %157 : vector<8x1xf32>
    %159 = math.rsqrt %158 : vector<8x1xf32>
    %160 = vector.broadcast %159 : vector<8x1xf32> to vector<8x128xf32>
    %161 = arith.mulf %151, %160 : vector<8x128xf32>
    %c0_70 = arith.constant 0 : index
    %c0_71 = arith.constant 0 : index
    %162 = vector.load %arg14[%c0_70, %c0_71] : memref<1x128xf32, #tpu.memory_space<vmem>>, vector<1x128xf32>
    %163 = vector.broadcast %162 : vector<1x128xf32> to vector<8x128xf32>
    %164 = arith.mulf %161, %163 : vector<8x128xf32>
    %c0_72 = arith.constant 0 : index
    %c0_73 = arith.constant 0 : index
    %165 = vector.load %arg15[%c0_72, %c0_73] : memref<1x128xf32, #tpu.memory_space<vmem>>, vector<1x128xf32>
    %166 = vector.broadcast %165 : vector<1x128xf32> to vector<8x128xf32>
    %167 = arith.addf %164, %166 : vector<8x128xf32>
    %c0_74 = arith.constant 0 : index
    %c0_75 = arith.constant 0 : index
    %c0_76 = arith.constant 0 : index
    %168 = vector.load %arg16[%c0_74, %c0_75, %c0_76] : memref<1x8x128xf32, #tpu.memory_space<vmem>>, vector<1x8x128xf32>
    %169 = vector.shape_cast %168 : vector<1x8x128xf32> to vector<8x128xf32>
    %170 = vector.shape_cast %167 : vector<8x128xf32> to vector<1x8x128xf32>
    tpu.vector_store %arg16[%c0_74, %c0_75, %c0_76], %170 {strides = array<i32>} : memref<1x8x128xf32, #tpu.memory_space<vmem>>, vector<1x8x128xf32>,
    return
  }
  func.func @transform_0(%arg0: i32) -> (i32, i32, i32) {
    %c0_i32 = arith.constant 0 : i32
    %c0_i32_0 = arith.constant 0 : i32
    %c0_i32_1 = arith.constant 0 : i32
    return %arg0, %c0_i32, %c0_i32_0 : i32, i32, i32
  }
  func.func @transform_1(%arg0: i32) -> (i32, i32) {
    %c0_i32 = arith.constant 0 : i32
    %c0_i32_0 = arith.constant 0 : i32
    %c0_i32_1 = arith.constant 0 : i32
    return %c0_i32, %c0_i32_0 : i32, i32
  }
  func.func @transform_2(%arg0: i32) -> (i32, i32) {
    %c0_i32 = arith.constant 0 : i32
    %c0_i32_0 = arith.constant 0 : i32
    %c0_i32_1 = arith.constant 0 : i32
    return %c0_i32, %c0_i32_0 : i32, i32
  }
  func.func @transform_3(%arg0: i32) -> (i32, i32) {
    %c0_i32 = arith.constant 0 : i32
    %c0_i32_0 = arith.constant 0 : i32
    %c0_i32_1 = arith.constant 0 : i32
    return %c0_i32, %c0_i32_0 : i32, i32
  }
  func.func @transform_4(%arg0: i32) -> (i32, i32) {
    %c0_i32 = arith.constant 0 : i32
    %c0_i32_0 = arith.constant 0 : i32
    %c0_i32_1 = arith.constant 0 : i32
    return %c0_i32, %c0_i32_0 : i32, i32
  }
  func.func @transform_5(%arg0: i32) -> (i32, i32) {
    %c0_i32 = arith.constant 0 : i32
    %c0_i32_0 = arith.constant 0 : i32
    %c0_i32_1 = arith.constant 0 : i32
    return %c0_i32, %c0_i32_0 : i32, i32
  }
  func.func @transform_6(%arg0: i32) -> (i32, i32) {
    %c0_i32 = arith.constant 0 : i32
    %c0_i32_0 = arith.constant 0 : i32
    %c0_i32_1 = arith.constant 0 : i32
    return %c0_i32, %c0_i32_0 : i32, i32
  }
  func.func @transform_7(%arg0: i32) -> (i32, i32) {
    %c0_i32 = arith.constant 0 : i32
    %c0_i32_0 = arith.constant 0 : i32
    %c0_i32_1 = arith.constant 0 : i32
    return %c0_i32, %c0_i32_0 : i32, i32
  }
  func.func @transform_8(%arg0: i32) -> (i32, i32) {
    %c0_i32 = arith.constant 0 : i32
    %c0_i32_0 = arith.constant 0 : i32
    %c0_i32_1 = arith.constant 0 : i32
    return %c0_i32, %c0_i32_0 : i32, i32
  }
  func.func @transform_9(%arg0: i32) -> (i32, i32) {
    %c0_i32 = arith.constant 0 : i32
    %c0_i32_0 = arith.constant 0 : i32
    %c0_i32_1 = arith.constant 0 : i32
    return %c0_i32, %c0_i32_0 : i32, i32
  }
  func.func @transform_10(%arg0: i32) -> (i32, i32) {
    %c0_i32 = arith.constant 0 : i32
    %c0_i32_0 = arith.constant 0 : i32
    %c0_i32_1 = arith.constant 0 : i32
    return %c0_i32, %c0_i32_0 : i32, i32
  }
  func.func @transform_11(%arg0: i32) -> (i32, i32) {
    %c0_i32 = arith.constant 0 : i32
    %c0_i32_0 = arith.constant 0 : i32
    %c0_i32_1 = arith.constant 0 : i32
    return %c0_i32, %c0_i32_0 : i32, i32
  }
  func.func @transform_12(%arg0: i32) -> (i32, i32) {
    %c0_i32 = arith.constant 0 : i32
    %c0_i32_0 = arith.constant 0 : i32
    %c0_i32_1 = arith.constant 0 : i32
    return %c0_i32, %c0_i32_0 : i32, i32
  }
  func.func @transform_13(%arg0: i32) -> (i32, i32) {
    %c0_i32 = arith.constant 0 : i32
    %c0_i32_0 = arith.constant 0 : i32
    %c0_i32_1 = arith.constant 0 : i32
    return %c0_i32, %c0_i32_0 : i32, i32
  }
  func.func @transform_14(%arg0: i32) -> (i32, i32) {
    %c0_i32 = arith.constant 0 : i32
    %c0_i32_0 = arith.constant 0 : i32
    %c0_i32_1 = arith.constant 0 : i32
    return %c0_i32, %c0_i32_0 : i32, i32
  }
  func.func @transform_15(%arg0: i32) -> (i32, i32, i32) {
    %c0_i32 = arith.constant 0 : i32
    %c0_i32_0 = arith.constant 0 : i32
    %c0_i32_1 = arith.constant 0 : i32
    return %arg0, %c0_i32, %c0_i32_0 : i32, i32, i32
  }
}

</mosaic_0001>

<llo_original>
// kernel: tpu_custom_call.1
$region0: #{tpu_custom_call.1}
  #allocation0 [shape = 'u32[]', space=smem, size = 0x4, offset = 0x4, fixed_abs, tag = 'smem constant byte address 0x4 - core index']
  #allocation1 [shape = 'u32[144,128]{1,0:T(1,128)}', space=vmem, size = 0x12000, scoped, tag = 'internal scratch']
  %s0 = inlined_call_operand.hbm [shape: f32[2,8,128], index: 0, kind: input, shape index: {}]
  %s1 = inlined_call_operand.hbm [shape: f32[1,128], index: 1, kind: input, shape index: {}]
  %s2 = inlined_call_operand.hbm [shape: f32[1,128], index: 2, kind: input, shape index: {}]
  %s3 = inlined_call_operand.hbm [shape: f32[128,384], index: 3, kind: input, shape index: {}]
  %s4 = inlined_call_operand.vmem [shape: f32[1,384], index: 4, kind: input, shape index: {}]
  %s5 = inlined_call_operand.hbm [shape: f32[128,128], index: 5, kind: input, shape index: {}]
  %s6 = inlined_call_operand.vmem [shape: f32[1,128], index: 6, kind: input, shape index: {}]
  %s7 = inlined_call_operand.vmem [shape: f32[1,128], index: 7, kind: input, shape index: {}]
  %s8 = inlined_call_operand.vmem [shape: f32[1,128], index: 8, kind: input, shape index: {}]
  %s9 = inlined_call_operand.hbm [shape: f32[128,512], index: 9, kind: input, shape index: {}]
  %s10 = inlined_call_operand.vmem [shape: f32[1,512], index: 10, kind: input, shape index: {}]
  %s11 = inlined_call_operand.hbm [shape: f32[512,128], index: 11, kind: input, shape index: {}]
  %s12 = inlined_call_operand.vmem [shape: f32[1,128], index: 12, kind: input, shape index: {}]
  %s13 = inlined_call_operand.vmem [shape: f32[1,128], index: 13, kind: input, shape index: {}]
  %s14 = inlined_call_operand.vmem [shape: f32[1,128], index: 14, kind: input, shape index: {}]
  %s15 = inlined_call_operand.hbm [shape: f32[2,8,128], index: 15, kind: output, shape index: {}]
  %s16 = sld [smem:[#allocation0]]
  $region121: #{tpu_custom_call.1} parent=0
    _
  %s18 = ssub.s32 1, %s16
  %s19 = scalar_select 0, %s18, %s16
  $region1: #{tpu_custom_call.1} parent=0
    #allocation2 [shape = 'u8[8192]{0}', space=vmem, size = 0x2000, scoped, tag = 'input window, operand 0']
    #allocation3 [shape = 's32[2]{0}', space=sflag, size = 0x8, scoped, tag = 'scoped memory for tpu_custom_call.1']
    #allocation4 [shape = 's32[2]{0}', space=sflag, size = 0x8, scoped, tag = 'scoped memory for tpu_custom_call.1']
    #allocation5 [shape = 'u8[512]{0}', space=vmem, size = 0x400, scoped, tag = 'input window, operand 1, single buffered']
    #allocation6 [shape = 's32[1]{0}', space=sflag, size = 0x4, scoped, tag = 'scoped memory for tpu_custom_call.1']
    #allocation7 [shape = 'u8[512]{0}', space=vmem, size = 0x400, scoped, tag = 'input window, operand 2, single buffered']
    #allocation8 [shape = 'u8[196608]{0}', space=vmem, size = 0x30000, scoped, tag = 'input window, operand 3, single buffered']
    #allocation9 [shape = 's32[1]{0}', space=sflag, size = 0x4, scoped, tag = 'scoped memory for tpu_custom_call.1']
    #allocation10 [shape = 'u8[65536]{0}', space=vmem, size = 0x10000, scoped, tag = 'input window, operand 5, single buffered']
    #allocation11 [shape = 'u8[262144]{0}', space=vmem, size = 0x40000, scoped, tag = 'input window, operand 9, single buffered']
    #allocation12 [shape = 's32[1]{0}', space=sflag, size = 0x4, scoped, tag = 'scoped memory for tpu_custom_call.1']
    #allocation13 [shape = 'u8[262144]{0}', space=vmem, size = 0x40000, scoped, tag = 'input window, operand 11, single buffered']
    #allocation14 [shape = 'u8[8192]{0}', space=vmem, size = 0x2000, scoped, tag = 'output window, operand 0']
    %20 = vsyncpa [#allocation3], 0
    %s21 = scalar_lea.sflag [#allocation3], 1
    %22 = vsyncpa %s21, 0
    %23 = vsyncpa [#allocation6], 0
    %24 = vsyncpa [#allocation9], 0
    %25 = vsyncpa [#allocation12], 0
    %26 = vsyncpa [#allocation4], 0
    %s27 = scalar_lea.sflag [#allocation4], 1
    %28 = vsyncpa %s27, 0
    loop: start=0, step=1, limit=4
    $region2: #{tpu_custom_call.1} parent=1 // loop_pre_header
      _
    $region3: #{tpu_custom_call.1} parent=1 // loop_header
      %s30 = sphi 0, %s34
      %p31 = scmp.ge.s32.totalorder %s30, 4
      %s40 = sphi 0, %s42
      %s43 = sphi 0, %s40
      %s44 = sphi 0, %s43
      %s60 = sphi 0, %s44
      %s64 = sphi 0, %s64
      %s66 = sphi 0, %s64
      %s67 = sphi 0, %s66
      %s81 = sphi 0, %s67
      %s85 = sphi 0, %s85
      %s87 = sphi 0, %s85
      %s88 = sphi 0, %s87
      %s102 = sphi 0, %s88
      %s106 = sphi 0, %s106
      %s108 = sphi 0, %s106
      %s109 = sphi 0, %s108
      %s123 = sphi 0, %s109
      %s127 = sphi 0, %s127
      %s129 = sphi 0, %s127
      %s130 = sphi 0, %s129
      %s144 = sphi 0, %s130
      %s148 = sphi 0, %s148
      %s150 = sphi 0, %s148
      %s151 = sphi 0, %s150
      %s165 = sphi 0, %s151
      %s169 = sphi 0, %s169
      %s171 = sphi 0, %s169
      %s172 = sphi 0, %s171
      %s186 = sphi 0, %s172
      %s190 = sphi 0, %s190
      %s192 = sphi 0, %s190
      %s193 = sphi 0, %s192
      %s207 = sphi 0, %s193
      %s211 = sphi 0, %s211
      %s213 = sphi 0, %s211
      %s214 = sphi 0, %s213
      %s228 = sphi 0, %s214
      %s232 = sphi 0, %s232
      %s234 = sphi 0, %s232
      %s235 = sphi 0, %s234
      %s249 = sphi 0, %s235
      %s253 = sphi 0, %s253
      %s255 = sphi 0, %s253
      %s256 = sphi 0, %s255
      %s270 = sphi 0, %s256
      %s274 = sphi 0, %s274
      %s276 = sphi 0, %s274
      %s277 = sphi 0, %s276
      %s291 = sphi 0, %s277
      %s295 = sphi 0, %s295
      %s297 = sphi 0, %s295
      %s298 = sphi 0, %s297
      %s312 = sphi 0, %s298
      %s316 = sphi 0, %s316
      %s318 = sphi 0, %s316
      %s319 = sphi 0, %s318
      %s333 = sphi 0, %s319
      %s337 = sphi 0, %s337
      %s339 = sphi 0, %s337
      %s340 = sphi 0, %s339
      %s354 = sphi 0, %s340
      %s360 = sphi 0, %s362
      %s363 = sphi 0, %s360
      %s364 = sphi 0, %s363
      %s380 = sphi 0, %s364
    $region4: #{tpu_custom_call.1} parent=1 // loop_header_branch
      %33 = sbr.rel (%p31) target = $region8
    $region5: #{tpu_custom_call.1} parent=1 // loop_body
      %s35 = ssub.s32 %s30, 1
      %s36 = ssub.s32 %s30, 2
      %s37 = sadd.s32 %s30, 1
      %s38 = ssub.s32 %s30, %s37
      %p39 = scmp.eq.s32.totalorder %s38, 0
      %s41 = sadd.s32 %s40, 1
      %s42 = scalar_select %p39, %s40, %s41
      %p45 = pneg %p39
      %p46 = scmp.eq.s32.totalorder %s30, 1
      %p47 = por %p45, %p46
      %p48 = scmp.ne.s32.totalorder %s40, %s43
      %p49 = scmp.eq.s32.totalorder %s30, 0
      %p50 = por %p48, %p49
      %p51 = scmp.ne.s32.totalorder %s40, %s43
      %p52 = scmp.eq.s32.totalorder %s35, 1
      %p53 = por %p51, %p52
      %p54 = scmp.ne.s32.totalorder %s43, %s44
      %p55 = scmp.eq.s32.totalorder %s35, 0
      %p56 = por %p54, %p55
      %p57 = scmp.ne.s32.totalorder %s43, %s44
      %p58 = scmp.eq.s32.totalorder %s36, 1
      %p59 = por %p57, %p58
      %p61 = scmp.ne.s32.totalorder %s44, %s60
      %p62 = scmp.eq.s32.totalorder %s36, 0
      %p63 = por %p61, %p62
      %s65 = sadd.s32 %s64, 1
      %p68 = scmp.eq.s32.totalorder %s30, 1
      %p69 = scmp.ne.s32.totalorder %s64, %s66
      %p70 = scmp.eq.s32.totalorder %s30, 0
      %p71 = por %p69, %p70
      %p72 = scmp.ne.s32.totalorder %s64, %s66
      %p73 = scmp.eq.s32.totalorder %s35, 1
      %p74 = por %p72, %p73
      %p75 = scmp.ne.s32.totalorder %s66, %s67
      %p76 = scmp.eq.s32.totalorder %s35, 0
      %p77 = por %p75, %p76
      %p78 = scmp.ne.s32.totalorder %s66, %s67
      %p79 = scmp.eq.s32.totalorder %s36, 1
      %p80 = por %p78, %p79
      %p82 = scmp.ne.s32.totalorder %s67, %s81
      %p83 = scmp.eq.s32.totalorder %s36, 0
      %p84 = por %p82, %p83
      %s86 = sadd.s32 %s85, 1
      %p89 = scmp.eq.s32.totalorder %s30, 1
      %p90 = scmp.ne.s32.totalorder %s85, %s87
      %p91 = scmp.eq.s32.totalorder %s30, 0
      %p92 = por %p90, %p91
      %p93 = scmp.ne.s32.totalorder %s85, %s87
      %p94 = scmp.eq.s32.totalorder %s35, 1
      %p95 = por %p93, %p94
      %p96 = scmp.ne.s32.totalorder %s87, %s88
      %p97 = scmp.eq.s32.totalorder %s35, 0
      %p98 = por %p96, %p97
      %p99 = scmp.ne.s32.totalorder %s87, %s88
      %p100 = scmp.eq.s32.totalorder %s36, 1
      %p101 = por %p99, %p100
      %p103 = scmp.ne.s32.totalorder %s88, %s102
      %p104 = scmp.eq.s32.totalorder %s36, 0
      %p105 = por %p103, %p104
      %s107 = sadd.s32 %s106, 1
      %p110 = scmp.eq.s32.totalorder %s30, 1
      %p111 = scmp.ne.s32.totalorder %s106, %s108
      %p112 = scmp.eq.s32.totalorder %s30, 0
      %p113 = por %p111, %p112
      %p114 = scmp.ne.s32.totalorder %s106, %s108
      %p115 = scmp.eq.s32.totalorder %s35, 1
      %p116 = por %p114, %p115
      %p117 = scmp.ne.s32.totalorder %s108, %s109
      %p118 = scmp.eq.s32.totalorder %s35, 0
      %p119 = por %p117, %p118
      %p120 = scmp.ne.s32.totalorder %s108, %s109
      %p121 = scmp.eq.s32.totalorder %s36, 1
      %p122 = por %p120, %p121
      %p124 = scmp.ne.s32.totalorder %s109, %s123
      %p125 = scmp.eq.s32.totalorder %s36, 0
      %p126 = por %p124, %p125
      %s128 = sadd.s32 %s127, 1
      %p131 = scmp.eq.s32.totalorder %s30, 1
      %p132 = scmp.ne.s32.totalorder %s127, %s129
      %p133 = scmp.eq.s32.totalorder %s30, 0
      %p134 = por %p132, %p133
      %p135 = scmp.ne.s32.totalorder %s127, %s129
      %p136 = scmp.eq.s32.totalorder %s35, 1
      %p137 = por %p135, %p136
      %p138 = scmp.ne.s32.totalorder %s129, %s130
      %p139 = scmp.eq.s32.totalorder %s35, 0
      %p140 = por %p138, %p139
      %p141 = scmp.ne.s32.totalorder %s129, %s130
      %p142 = scmp.eq.s32.totalorder %s36, 1
      %p143 = por %p141, %p142
      %p145 = scmp.ne.s32.totalorder %s130, %s144
      %p146 = scmp.eq.s32.totalorder %s36, 0
      %p147 = por %p145, %p146
      %s149 = sadd.s32 %s148, 1
      %p152 = scmp.eq.s32.totalorder %s30, 1
      %p153 = scmp.ne.s32.totalorder %s148, %s150
      %p154 = scmp.eq.s32.totalorder %s30, 0
      %p155 = por %p153, %p154
      %p156 = scmp.ne.s32.totalorder %s148, %s150
      %p157 = scmp.eq.s32.totalorder %s35, 1
      %p158 = por %p156, %p157
      %p159 = scmp.ne.s32.totalorder %s150, %s151
      %p160 = scmp.eq.s32.totalorder %s35, 0
      %p161 = por %p159, %p160
      %p162 = scmp.ne.s32.totalorder %s150, %s151
      %p163 = scmp.eq.s32.totalorder %s36, 1
      %p164 = por %p162, %p163
      %p166 = scmp.ne.s32.totalorder %s151, %s165
      %p167 = scmp.eq.s32.totalorder %s36, 0
      %p168 = por %p166, %p167
      %s170 = sadd.s32 %s169, 1
      %p173 = scmp.eq.s32.totalorder %s30, 1
      %p174 = scmp.ne.s32.totalorder %s169, %s171
      %p175 = scmp.eq.s32.totalorder %s30, 0
      %p176 = por %p174, %p175
      %p177 = scmp.ne.s32.totalorder %s169, %s171
      %p178 = scmp.eq.s32.totalorder %s35, 1
      %p179 = por %p177, %p178
      %p180 = scmp.ne.s32.totalorder %s171, %s172
      %p181 = scmp.eq.s32.totalorder %s35, 0
      %p182 = por %p180, %p181
      %p183 = scmp.ne.s32.totalorder %s171, %s172
      %p184 = scmp.eq.s32.totalorder %s36, 1
      %p185 = por %p183, %p184
      %p187 = scmp.ne.s32.totalorder %s172, %s186
      %p188 = scmp.eq.s32.totalorder %s36, 0
      %p189 = por %p187, %p188
      %s191 = sadd.s32 %s190, 1
      %p194 = scmp.eq.s32.totalorder %s30, 1
      %p195 = scmp.ne.s32.totalorder %s190, %s192
      %p196 = scmp.eq.s32.totalorder %s30, 0
      %p197 = por %p195, %p196
      %p198 = scmp.ne.s32.totalorder %s190, %s192
      %p199 = scmp.eq.s32.totalorder %s35, 1
      %p200 = por %p198, %p199
      %p201 = scmp.ne.s32.totalorder %s192, %s193
      %p202 = scmp.eq.s32.totalorder %s35, 0
      %p203 = por %p201, %p202
      %p204 = scmp.ne.s32.totalorder %s192, %s193
      %p205 = scmp.eq.s32.totalorder %s36, 1
      %p206 = por %p204, %p205
      %p208 = scmp.ne.s32.totalorder %s193, %s207
      %p209 = scmp.eq.s32.totalorder %s36, 0
      %p210 = por %p208, %p209
      %s212 = sadd.s32 %s211, 1
      %p215 = scmp.eq.s32.totalorder %s30, 1
      %p216 = scmp.ne.s32.totalorder %s211, %s213
      %p217 = scmp.eq.s32.totalorder %s30, 0
      %p218 = por %p216, %p217
      %p219 = scmp.ne.s32.totalorder %s211, %s213
      %p220 = scmp.eq.s32.totalorder %s35, 1
      %p221 = por %p219, %p220
      %p222 = scmp.ne.s32.totalorder %s213, %s214
      %p223 = scmp.eq.s32.totalorder %s35, 0
      %p224 = por %p222, %p223
      %p225 = scmp.ne.s32.totalorder %s213, %s214
      %p226 = scmp.eq.s32.totalorder %s36, 1
      %p227 = por %p225, %p226
      %p229 = scmp.ne.s32.totalorder %s214, %s228
      %p230 = scmp.eq.s32.totalorder %s36, 0
      %p231 = por %p229, %p230
      %s233 = sadd.s32 %s232, 1
      %p236 = scmp.eq.s32.totalorder %s30, 1
      %p237 = scmp.ne.s32.totalorder %s232, %s234
      %p238 = scmp.eq.s32.totalorder %s30, 0
      %p239 = por %p237, %p238
      %p240 = scmp.ne.s32.totalorder %s232, %s234
      %p241 = scmp.eq.s32.totalorder %s35, 1
      %p242 = por %p240, %p241
      %p243 = scmp.ne.s32.totalorder %s234, %s235
      %p244 = scmp.eq.s32.totalorder %s35, 0
      %p245 = por %p243, %p244
      %p246 = scmp.ne.s32.totalorder %s234, %s235
      %p247 = scmp.eq.s32.totalorder %s36, 1
      %p248 = por %p246, %p247
      %p250 = scmp.ne.s32.totalorder %s235, %s249
      %p251 = scmp.eq.s32.totalorder %s36, 0
      %p252 = por %p250, %p251
      %s254 = sadd.s32 %s253, 1
      %p257 = scmp.eq.s32.totalorder %s30, 1
      %p258 = scmp.ne.s32.totalorder %s253, %s255
      %p259 = scmp.eq.s32.totalorder %s30, 0
      %p260 = por %p258, %p259
      %p261 = scmp.ne.s32.totalorder %s253, %s255
      %p262 = scmp.eq.s32.totalorder %s35, 1
      %p263 = por %p261, %p262
      %p264 = scmp.ne.s32.totalorder %s255, %s256
      %p265 = scmp.eq.s32.totalorder %s35, 0
      %p266 = por %p264, %p265
      %p267 = scmp.ne.s32.totalorder %s255, %s256
      %p268 = scmp.eq.s32.totalorder %s36, 1
      %p269 = por %p267, %p268
      %p271 = scmp.ne.s32.totalorder %s256, %s270
      %p272 = scmp.eq.s32.totalorder %s36, 0
      %p273 = por %p271, %p272
      %s275 = sadd.s32 %s274, 1
      %p278 = scmp.eq.s32.totalorder %s30, 1
      %p279 = scmp.ne.s32.totalorder %s274, %s276
      %p280 = scmp.eq.s32.totalorder %s30, 0
      %p281 = por %p279, %p280
      %p282 = scmp.ne.s32.totalorder %s274, %s276
      %p283 = scmp.eq.s32.totalorder %s35, 1
      %p284 = por %p282, %p283
      %p285 = scmp.ne.s32.totalorder %s276, %s277
      %p286 = scmp.eq.s32.totalorder %s35, 0
      %p287 = por %p285, %p286
      %p288 = scmp.ne.s32.totalorder %s276, %s277
      %p289 = scmp.eq.s32.totalorder %s36, 1
      %p290 = por %p288, %p289
      %p292 = scmp.ne.s32.totalorder %s277, %s291
      %p293 = scmp.eq.s32.totalorder %s36, 0
      %p294 = por %p292, %p293
      %s296 = sadd.s32 %s295, 1
      %p299 = scmp.eq.s32.totalorder %s30, 1
      %p300 = scmp.ne.s32.totalorder %s295, %s297
      %p301 = scmp.eq.s32.totalorder %s30, 0
      %p302 = por %p300, %p301
      %p303 = scmp.ne.s32.totalorder %s295, %s297
      %p304 = scmp.eq.s32.totalorder %s35, 1
      %p305 = por %p303, %p304
      %p306 = scmp.ne.s32.totalorder %s297, %s298
      %p307 = scmp.eq.s32.totalorder %s35, 0
      %p308 = por %p306, %p307
      %p309 = scmp.ne.s32.totalorder %s297, %s298
      %p310 = scmp.eq.s32.totalorder %s36, 1
      %p311 = por %p309, %p310
      %p313 = scmp.ne.s32.totalorder %s298, %s312
      %p314 = scmp.eq.s32.totalorder %s36, 0
      %p315 = por %p313, %p314
      %s317 = sadd.s32 %s316, 1
      %p320 = scmp.eq.s32.totalorder %s30, 1
      %p321 = scmp.ne.s32.totalorder %s316, %s318
      %p322 = scmp.eq.s32.totalorder %s30, 0
      %p323 = por %p321, %p322
      %p324 = scmp.ne.s32.totalorder %s316, %s318
      %p325 = scmp.eq.s32.totalorder %s35, 1
      %p326 = por %p324, %p325
      %p327 = scmp.ne.s32.totalorder %s318, %s319
      %p328 = scmp.eq.s32.totalorder %s35, 0
      %p329 = por %p327, %p328
      %p330 = scmp.ne.s32.totalorder %s318, %s319
      %p331 = scmp.eq.s32.totalorder %s36, 1
      %p332 = por %p330, %p331
      %p334 = scmp.ne.s32.totalorder %s319, %s333
      %p335 = scmp.eq.s32.totalorder %s36, 0
      %p336 = por %p334, %p335
      %s338 = sadd.s32 %s337, 1
      %p341 = scmp.eq.s32.totalorder %s30, 1
      %p342 = scmp.ne.s32.totalorder %s337, %s339
      %p343 = scmp.eq.s32.totalorder %s30, 0
      %p344 = por %p342, %p343
      %p345 = scmp.ne.s32.totalorder %s337, %s339
      %p346 = scmp.eq.s32.totalorder %s35, 1
      %p347 = por %p345, %p346
      %p348 = scmp.ne.s32.totalorder %s339, %s340
      %p349 = scmp.eq.s32.totalorder %s35, 0
      %p350 = por %p348, %p349
      %p351 = scmp.ne.s32.totalorder %s339, %s340
      %p352 = scmp.eq.s32.totalorder %s36, 1
      %p353 = por %p351, %p352
      %p355 = scmp.ne.s32.totalorder %s340, %s354
      %p356 = scmp.eq.s32.totalorder %s36, 0
      %p357 = por %p355, %p356
      %s358 = ssub.s32 %s30, %s37
      %p359 = scmp.eq.s32.totalorder %s358, 0
      %s361 = sadd.s32 %s360, 1
      %s362 = scalar_select %p359, %s360, %s361
      %p365 = pneg %p359
      %p366 = scmp.eq.s32.totalorder %s30, 1
      %p367 = por %p365, %p366
      %p368 = scmp.ne.s32.totalorder %s360, %s363
      %p369 = scmp.eq.s32.totalorder %s30, 0
      %p370 = por %p368, %p369
      %p371 = scmp.ne.s32.totalorder %s360, %s363
      %p372 = scmp.eq.s32.totalorder %s35, 1
      %p373 = por %p371, %p372
      %p374 = scmp.ne.s32.totalorder %s363, %s364
      %p375 = scmp.eq.s32.totalorder %s35, 0
      %p376 = por %p374, %p375
      %p377 = scmp.ne.s32.totalorder %s363, %s364
      %p378 = scmp.eq.s32.totalorder %s36, 1
      %p379 = por %p377, %p378
      %p381 = scmp.ne.s32.totalorder %s364, %s380
      %p382 = scmp.eq.s32.totalorder %s36, 0
      %p383 = por %p381, %p382
      %p384 = scmp.le.s32.totalorder 1, %s30
      %p385 = scmp.lt.s32.totalorder %s30, 3
      %p386 = pnand %p384, %p385
      %p387 = pneg %p386
      // Predicated region
      $region9: #{tpu_custom_call.1} parent=5 // pred_check
        _
      $region10: #{tpu_custom_call.1} parent=5 // pred_check_branch
        %389 = sbr.rel (%p386) target = $region12
      $region11: #{tpu_custom_call.1} parent=5 // pred_region
        %s390 = ssub.s32 %s30, 1
        // Predicated region
        $region13: #{tpu_custom_call.1} parent=11 // pred_check
          %p391 = pneg %p77
        $region14: #{tpu_custom_call.1} parent=11 // pred_check_branch
          %393 = sbr.rel (%p391) target = $region16
        $region15: #{tpu_custom_call.1} parent=11 // pred_region
          %s395 = ssub.s32 16, 16
          %396 = vsyncadd [#allocation6], %s395
          %s398 = sshll.u32 [#allocation5], 4
          %s399 = int_to_ptr.vmem [resolvable:$true] %s398
          %401 = dma.hbm_to_vmem [thread:$0]  %s1, 16, %s399, [#allocation6]
        $region16: #{tpu_custom_call.1} parent=11 // pred_fallthru
          _
        // Predicated region
        $region17: #{tpu_custom_call.1} parent=11 // pred_check
          %p402 = pneg %p98
        $region18: #{tpu_custom_call.1} parent=11 // pred_check_branch
          %404 = sbr.rel (%p402) target = $region20
        $region19: #{tpu_custom_call.1} parent=11 // pred_region
          %s406 = ssub.s32 16, 16
          %407 = vsyncadd [#allocation6], %s406
          %s409 = sshll.u32 [#allocation7], 4
          %s410 = int_to_ptr.vmem [resolvable:$true] %s409
          %412 = dma.hbm_to_vmem [thread:$0]  %s2, 16, %s410, [#allocation6]
        $region20: #{tpu_custom_call.1} parent=11 // pred_fallthru
          _
        // Predicated region
        $region21: #{tpu_custom_call.1} parent=11 // pred_check
          %p413 = pneg %p119
        $region22: #{tpu_custom_call.1} parent=11 // pred_check_branch
          %415 = sbr.rel (%p413) target = $region24
        $region23: #{tpu_custom_call.1} parent=11 // pred_region
          %s417 = ssub.s32 6144, 6144
          %418 = vsyncadd [#allocation9], %s417
          %s419 = sshll.u32 [#allocation8], 4
          %s420 = int_to_ptr.vmem [resolvable:$true] %s419
          %425 = dma.hbm_to_vmem [thread:$0]  %s3, 6144, %s420, [#allocation9], 384, 384, 24
        $region24: #{tpu_custom_call.1} parent=11 // pred_fallthru
          _
        // Predicated region
        $region25: #{tpu_custom_call.1} parent=11 // pred_check
          %p426 = pneg %p140
        $region26: #{tpu_custom_call.1} parent=11 // pred_check_branch
          %428 = sbr.rel (%p426) target = $region28
        $region27: #{tpu_custom_call.1} parent=11 // pred_region
          _
        $region28: #{tpu_custom_call.1} parent=11 // pred_fallthru
          _
        // Predicated region
        $region29: #{tpu_custom_call.1} parent=11 // pred_check
          %p429 = pneg %p161
        $region30: #{tpu_custom_call.1} parent=11 // pred_check_branch
          %431 = sbr.rel (%p429) target = $region32
        $region31: #{tpu_custom_call.1} parent=11 // pred_region
          %s433 = ssub.s32 2048, 2048
          %434 = vsyncadd [#allocation9], %s433
          %s435 = sshll.u32 [#allocation10], 4
          %s436 = int_to_ptr.vmem [resolvable:$true] %s435
          %441 = dma.hbm_to_vmem [thread:$0]  %s5, 2048, %s436, [#allocation9], 128, 128, 8
        $region32: #{tpu_custom_call.1} parent=11 // pred_fallthru
          _
        // Predicated region
        $region33: #{tpu_custom_call.1} parent=11 // pred_check
          %p442 = pneg %p182
        $region34: #{tpu_custom_call.1} parent=11 // pred_check_branch
          %444 = sbr.rel (%p442) target = $region36
        $region35: #{tpu_custom_call.1} parent=11 // pred_region
          _
        $region36: #{tpu_custom_call.1} parent=11 // pred_fallthru
          _
        // Predicated region
        $region37: #{tpu_custom_call.1} parent=11 // pred_check
          %p445 = pneg %p203
        $region38: #{tpu_custom_call.1} parent=11 // pred_check_branch
          %447 = sbr.rel (%p445) target = $region40
        $region39: #{tpu_custom_call.1} parent=11 // pred_region
          _
        $region40: #{tpu_custom_call.1} parent=11 // pred_fallthru
          _
        // Predicated region
        $region41: #{tpu_custom_call.1} parent=11 // pred_check
          %p448 = pneg %p224
        $region42: #{tpu_custom_call.1} parent=11 // pred_check_branch
          %450 = sbr.rel (%p448) target = $region44
        $region43: #{tpu_custom_call.1} parent=11 // pred_region
          _
        $region44: #{tpu_custom_call.1} parent=11 // pred_fallthru
          _
        // Predicated region
        $region45: #{tpu_custom_call.1} parent=11 // pred_check
          %p451 = pneg %p245
        $region46: #{tpu_custom_call.1} parent=11 // pred_check_branch
          %453 = sbr.rel (%p451) target = $region48
        $region47: #{tpu_custom_call.1} parent=11 // pred_region
          %s455 = ssub.s32 8192, 8192
          %456 = vsyncadd [#allocation12], %s455
          %s457 = sshll.u32 [#allocation11], 4
          %s458 = int_to_ptr.vmem [resolvable:$true] %s457
          %463 = dma.hbm_to_vmem [thread:$0]  %s9, 8192, %s458, [#allocation12], 512, 512, 32
        $region48: #{tpu_custom_call.1} parent=11 // pred_fallthru
          _
        // Predicated region
        $region49: #{tpu_custom_call.1} parent=11 // pred_check
          %p464 = pneg %p266
        $region50: #{tpu_custom_call.1} parent=11 // pred_check_branch
          %466 = sbr.rel (%p464) target = $region52
        $region51: #{tpu_custom_call.1} parent=11 // pred_region
          _
        $region52: #{tpu_custom_call.1} parent=11 // pred_fallthru
          _
        // Predicated region
        $region53: #{tpu_custom_call.1} parent=11 // pred_check
          %p467 = pneg %p287
        $region54: #{tpu_custom_call.1} parent=11 // pred_check_branch
          %469 = sbr.rel (%p467) target = $region56
        $region55: #{tpu_custom_call.1} parent=11 // pred_region
          %s471 = ssub.s32 8192, 8192
          %472 = vsyncadd [#allocation12], %s471
          %s473 = sshll.u32 [#allocation13], 4
          %s474 = int_to_ptr.vmem [resolvable:$true] %s473
          %479 = dma.hbm_to_vmem [thread:$0]  %s11, 8192, %s474, [#allocation12], 128, 128, 8
        $region56: #{tpu_custom_call.1} parent=11 // pred_fallthru
          _
        // Predicated region
        $region57: #{tpu_custom_call.1} parent=11 // pred_check
          %p480 = pneg %p308
        $region58: #{tpu_custom_call.1} parent=11 // pred_check_branch
          %482 = sbr.rel (%p480) target = $region60
        $region59: #{tpu_custom_call.1} parent=11 // pred_region
          _
        $region60: #{tpu_custom_call.1} parent=11 // pred_fallthru
          _
        // Predicated region
        $region61: #{tpu_custom_call.1} parent=11 // pred_check
          %p483 = pneg %p329
        $region62: #{tpu_custom_call.1} parent=11 // pred_check_branch
          %485 = sbr.rel (%p483) target = $region64
        $region63: #{tpu_custom_call.1} parent=11 // pred_region
          _
        $region64: #{tpu_custom_call.1} parent=11 // pred_fallthru
          _
        // Predicated region
        $region65: #{tpu_custom_call.1} parent=11 // pred_check
          %p486 = pneg %p350
        $region66: #{tpu_custom_call.1} parent=11 // pred_check_branch
          %488 = sbr.rel (%p486) target = $region68
        $region67: #{tpu_custom_call.1} parent=11 // pred_region
          _
        $region68: #{tpu_custom_call.1} parent=11 // pred_fallthru
          _
      $region12: #{tpu_custom_call.1} parent=5 // pred_fallthru
        _
      %p489 = scmp.lt.s32.totalorder %s30, 2
      // Predicated region
      $region69: #{tpu_custom_call.1} parent=5 // pred_check
        %p490 = pneg %p489
      $region70: #{tpu_custom_call.1} parent=5 // pred_check_branch
        %492 = sbr.rel (%p490) target = $region72
      $region71: #{tpu_custom_call.1} parent=5 // pred_region
        // Predicated region
        $region73: #{tpu_custom_call.1} parent=71 // pred_check
          %p493 = pneg %p50
        $region74: #{tpu_custom_call.1} parent=71 // pred_check_branch
          %495 = sbr.rel (%p493) target = $region76
        $region75: #{tpu_custom_call.1} parent=71 // pred_region
          %s496 = sand.u32 %s40, 1
          %s497 = scalar_lea.sflag [#allocation3], %s496
          %s498 = sand.u32 %s40, 1
          %s499 = smul.addr %s498, 8
          %s500 = scalar_lea.vmem [#allocation2], %s499
          %s502 = ssub.s32 128, 128
          %503 = vsyncadd %s497, %s502
          %s504 = smul.addr %s30, 128
          %s505 = scalar_lea.hbm %s0, %s504
          %s507 = sshll.u32 %s500, 4
          %s508 = int_to_ptr.vmem [resolvable:$true] %s507
          %510 = dma.hbm_to_vmem [thread:$0]  %s505, 128, %s508, %s497
        $region76: #{tpu_custom_call.1} parent=71 // pred_fallthru
          _
      $region72: #{tpu_custom_call.1} parent=5 // pred_fallthru
        _
      %p511 = scmp.le.s32.totalorder 1, %s30
      %p512 = scmp.lt.s32.totalorder %s30, 3
      %p513 = pnand %p511, %p512
      %p514 = pneg %p513
      // Predicated region
      $region77: #{tpu_custom_call.1} parent=5 // pred_check
        _
      $region78: #{tpu_custom_call.1} parent=5 // pred_check_branch
        %516 = sbr.rel (%p513) target = $region80
      $region79: #{tpu_custom_call.1} parent=5 // pred_region
        %s517 = ssub.s32 %s30, 1
        %s518 = sand.u32 %s43, 1
        %s519 = scalar_lea.sflag [#allocation3], %s518
        %s520 = sand.u32 %s43, 1
        %s521 = smul.addr %s520, 8
        %s522 = scalar_lea.vmem [#allocation2], %s521
        // Predicated region
        $region81: #{tpu_custom_call.1} parent=79 // pred_check
          %p523 = pneg %p56
        $region82: #{tpu_custom_call.1} parent=79 // pred_check_branch
          %525 = sbr.rel (%p523) target = $region84
        $region83: #{tpu_custom_call.1} parent=79 // pred_region
          %526 = dma.done %s519, 128
        $region84: #{tpu_custom_call.1} parent=79 // pred_fallthru
          _
        // Predicated region
        $region85: #{tpu_custom_call.1} parent=79 // pred_check
          %p527 = pneg %p77
        $region86: #{tpu_custom_call.1} parent=79 // pred_check_branch
          %529 = sbr.rel (%p527) target = $region88
        $region87: #{tpu_custom_call.1} parent=79 // pred_region
          %530 = dma.done [#allocation6], 16
        $region88: #{tpu_custom_call.1} parent=79 // pred_fallthru
          _
        // Predicated region
        $region89: #{tpu_custom_call.1} parent=79 // pred_check
          %p531 = pneg %p98
        $region90: #{tpu_custom_call.1} parent=79 // pred_check_branch
          %533 = sbr.rel (%p531) target = $region92
        $region91: #{tpu_custom_call.1} parent=79 // pred_region
          %534 = dma.done [#allocation6], 16
        $region92: #{tpu_custom_call.1} parent=79 // pred_fallthru
          _
        // Predicated region
        $region93: #{tpu_custom_call.1} parent=79 // pred_check
          %p535 = pneg %p119
        $region94: #{tpu_custom_call.1} parent=79 // pred_check_branch
          %537 = sbr.rel (%p535) target = $region96
        $region95: #{tpu_custom_call.1} parent=79 // pred_region
          %538 = dma.done [#allocation9], 6144
        $region96: #{tpu_custom_call.1} parent=79 // pred_fallthru
          _
        // Predicated region
        $region97: #{tpu_custom_call.1} parent=79 // pred_check
          %p539 = pneg %p161
        $region98: #{tpu_custom_call.1} parent=79 // pred_check_branch
          %541 = sbr.rel (%p539) target = $region100
        $region99: #{tpu_custom_call.1} parent=79 // pred_region
          %542 = dma.done [#allocation9], 2048
        $region100: #{tpu_custom_call.1} parent=79 // pred_fallthru
          _
        // Predicated region
        $region101: #{tpu_custom_call.1} parent=79 // pred_check
          %p543 = pneg %p245
        $region102: #{tpu_custom_call.1} parent=79 // pred_check_branch
          %545 = sbr.rel (%p543) target = $region104
        $region103: #{tpu_custom_call.1} parent=79 // pred_region
          %546 = dma.done [#allocation12], 8192
        $region104: #{tpu_custom_call.1} parent=79 // pred_fallthru
          _
        // Predicated region
        $region105: #{tpu_custom_call.1} parent=79 // pred_check
          %p547 = pneg %p287
        $region106: #{tpu_custom_call.1} parent=79 // pred_check_branch
          %549 = sbr.rel (%p547) target = $region108
        $region107: #{tpu_custom_call.1} parent=79 // pred_region
          %550 = dma.done [#allocation12], 8192
        $region108: #{tpu_custom_call.1} parent=79 // pred_fallthru
          _
        %s551 = sand.u32 %s43, 1
        %s552 = scalar_lea.sflag [#allocation3], %s551
        %s553 = sand.u32 %s43, 1
        %s554 = smul.addr %s553, 8
        %s555 = scalar_lea.vmem [#allocation2], %s554
        %p556 = pneg %p56
        %p557 = pneg %p53
        %p558 = pneg %p77
        %p559 = pneg %p74
        %p560 = pneg %p98
        %p561 = pneg %p95
        %p562 = pneg %p119
        %p563 = pneg %p116
        %p564 = pneg %p140
        %p565 = pneg %p137
        %p566 = pneg %p161
        %p567 = pneg %p158
        %p568 = pneg %p182
        %p569 = pneg %p179
        %p570 = pneg %p203
        %p571 = pneg %p200
        %p572 = pneg %p224
        %p573 = pneg %p221
        %p574 = pneg %p245
        %p575 = pneg %p242
        %p576 = pneg %p266
        %p577 = pneg %p263
        %p578 = pneg %p287
        %p579 = pneg %p284
        %p580 = pneg %p308
        %p581 = pneg %p305
        %p582 = pneg %p329
        %p583 = pneg %p326
        %p584 = pneg %p350
        %p585 = pneg %p347
        %p586 = pneg %p376
        %p587 = pneg %p373
        %s588 = sand.u32 %s363, 1
        %s589 = scalar_lea.sflag [#allocation4], %s588
        %s590 = sand.u32 %s363, 1
        %s591 = smul.addr %s590, 8
        %s592 = scalar_lea.vmem [#allocation14], %s591
        %v593 = vld [vmem:[%s522] sm:$0xff]
        %594 = vadd.xlane.f32.xlu0 %v593
        %v595 = vpop.xlane.xlu0 %594
        %v596 = vrcp.pop 128.0
        %v597 = vmul.f32 %v595, %v596
        %v598 = vsub.f32 %v593, %v597
        %v599 = vmul.f32 %v598, %v598
        %600 = vadd.xlane.f32.xlu0 %v599
        %v601 = vpop.xlane.xlu0 %600
        %v602 = vmul.f32 %v601, %v596
        %v603 = vadd.f32 %v602, 1e-05
        %v604 = vrsqrt.pop %v603
        %v605 = vmul.f32 %v598, %v604
        %v606 = vld [vmem:[#allocation5] sm:$0x1]
        %v608 = vlaneseq
        %v609 = vshrl.u32 %v608, 7
        %v610 = vsub.s32 0, %v609
        %v611 = vrot.slane %v606, %v610
        %v613 = vmul.f32 %v605, %v611
        %v614 = vld [vmem:[#allocation7] sm:$0x1]
        %v616 = vlaneseq
        %v617 = vshrl.u32 %v616, 7
        %v618 = vsub.s32 0, %v617
        %v619 = vrot.slane %v614, %v618
        %v621 = vadd.f32 %v613, %v619
        %v622 = vld [vmem:[#allocation8] sm:$0xff]
        %v623 = vld [vmem:[#allocation8 + $0x8] sm:$0xff]
        %v624 = vld [vmem:[#allocation8 + $0x10] sm:$0xff]
        %v625 = vld [vmem:[#allocation8 + $0x18] sm:$0xff]
        %v626 = vld [vmem:[#allocation8 + $0x20] sm:$0xff]
        %v627 = vld [vmem:[#allocation8 + $0x28] sm:$0xff]
        %v628 = vld [vmem:[#allocation8 + $0x30] sm:$0xff]
        %v629 = vld [vmem:[#allocation8 + $0x38] sm:$0xff]
        %v630 = vld [vmem:[#allocation8 + $0x40] sm:$0xff]
        %v631 = vld [vmem:[#allocation8 + $0x48] sm:$0xff]
        %v632 = vld [vmem:[#allocation8 + $0x50] sm:$0xff]
        %v633 = vld [vmem:[#allocation8 + $0x58] sm:$0xff]
        %v634 = vld [vmem:[#allocation8 + $0x60] sm:$0xff]
        %v635 = vld [vmem:[#allocation8 + $0x68] sm:$0xff]
        %v636 = vld [vmem:[#allocation8 + $0x70] sm:$0xff]
        %v637 = vld [vmem:[#allocation8 + $0x78] sm:$0xff]
        %v638 = vld [vmem:[#allocation8 + $0x80] sm:$0xff]
        %v639 = vld [vmem:[#allocation8 + $0x88] sm:$0xff]
        %v640 = vld [vmem:[#allocation8 + $0x90] sm:$0xff]
        %v641 = vld [vmem:[#allocation8 + $0x98] sm:$0xff]
        %v642 = vld [vmem:[#allocation8 + $0xa0] sm:$0xff]
        %v643 = vld [vmem:[#allocation8 + $0xa8] sm:$0xff]
        %v644 = vld [vmem:[#allocation8 + $0xb0] sm:$0xff]
        %v645 = vld [vmem:[#allocation8 + $0xb8] sm:$0xff]
        %v646 = vld [vmem:[#allocation8 + $0xc0] sm:$0xff]
        %v647 = vld [vmem:[#allocation8 + $0xc8] sm:$0xff]
        %v648 = vld [vmem:[#allocation8 + $0xd0] sm:$0xff]
        %v649 = vld [vmem:[#allocation8 + $0xd8] sm:$0xff]
        %v650 = vld [vmem:[#allocation8 + $0xe0] sm:$0xff]
        %v651 = vld [vmem:[#allocation8 + $0xe8] sm:$0xff]
        %v652 = vld [vmem:[#allocation8 + $0xf0] sm:$0xff]
        %v653 = vld [vmem:[#allocation8 + $0xf8] sm:$0xff]
        %v654 = vld [vmem:[#allocation8 + $0x100] sm:$0xff]
        %v655 = vld [vmem:[#allocation8 + $0x108] sm:$0xff]
        %v656 = vld [vmem:[#allocation8 + $0x110] sm:$0xff]
        %v657 = vld [vmem:[#allocation8 + $0x118] sm:$0xff]
        %v658 = vld [vmem:[#allocation8 + $0x120] sm:$0xff]
        %v659 = vld [vmem:[#allocation8 + $0x128] sm:$0xff]
        %v660 = vld [vmem:[#allocation8 + $0x130] sm:$0xff]
        %v661 = vld [vmem:[#allocation8 + $0x138] sm:$0xff]
        %v662 = vld [vmem:[#allocation8 + $0x140] sm:$0xff]
        %v663 = vld [vmem:[#allocation8 + $0x148] sm:$0xff]
        %v664 = vld [vmem:[#allocation8 + $0x150] sm:$0xff]
        %v665 = vld [vmem:[#allocation8 + $0x158] sm:$0xff]
        %v666 = vld [vmem:[#allocation8 + $0x160] sm:$0xff]
        %v667 = vld [vmem:[#allocation8 + $0x168] sm:$0xff]
        %v668 = vld [vmem:[#allocation8 + $0x170] sm:$0xff]
        %v669 = vld [vmem:[#allocation8 + $0x178] sm:$0xff]
        %v670 = vld [vmem:[%s4] sm:$0x7]
        %v672 = vlaneseq
        %v673 = vshrl.u32 %v672, 7
        %v674 = vsub.s32 0, %v673
        %v675 = vrot.slane %v670, %v674
        %v676 = vlaneseq
        %v677 = vshrl.u32 %v676, 7
        %v678 = vsub.s32 1, %v677
        %v679 = vrot.slane %v670, %v678
        %v680 = vlaneseq
        %v681 = vshrl.u32 %v680, 7
        %v682 = vsub.s32 2, %v681
        %v683 = vrot.slane %v670, %v682
        %687 = vmatprep.subr.mxu0 %v623
        %688 = vmatpush1.msra.mxu0 %v622
        %689 = vmatprep.subr.mxu0 %v626
        %690 = vmatpush1.msra.mxu0 %v625
        %691 = vmatprep.subr.mxu0 %v629
        %692 = vmatpush1.msra.mxu0 %v628
        %693 = vmatprep.subr.mxu0 %v632
        %694 = vmatpush1.msra.mxu0 %v631
        %695 = vmatprep.subr.mxu0 %v635
        %696 = vmatpush1.msra.mxu0 %v634
        %697 = vmatprep.subr.mxu0 %v638
        %698 = vmatpush1.msra.mxu0 %v637
        %699 = vmatprep.subr.mxu0 %v641
        %700 = vmatpush1.msra.mxu0 %v640
        %701 = vmatprep.subr.mxu0 %v644
        %702 = vmatpush1.msra.mxu0 %v643
        %703 = vmatprep.subr.mxu0 %v647
        %704 = vmatpush1.msra.mxu0 %v646
        %705 = vmatprep.subr.mxu0 %v650
        %706 = vmatpush1.msra.mxu0 %v649
        %707 = vmatprep.subr.mxu0 %v653
        %708 = vmatpush1.msra.mxu0 %v652
        %709 = vmatprep.subr.mxu0 %v656
        %710 = vmatpush1.msra.mxu0 %v655
        %711 = vmatprep.subr.mxu0 %v659
        %712 = vmatpush1.msra.mxu0 %v658
        %713 = vmatprep.subr.mxu0 %v662
        %714 = vmatpush1.msra.mxu0 %v661
        %715 = vmatprep.subr.mxu0 %v665
        %716 = vmatpush1.msra.mxu0 %v664
        %717 = vmatprep.subr.mxu0 %v668
        %718 = vmatpush1.msra.mxu0 %v667
        %719 = vmatprep.subr.mxu0 0.0
        %720 = vmatpush1.msra.mxu0 0.0
        %721 = vmatprep.subr.mxu0 0.0
        %722 = vmatpush1.msra.mxu0 0.0
        %723 = vmatprep.subr.mxu0 0.0
        %724 = vmatpush1.msra.mxu0 0.0
        %725 = vmatprep.subr.mxu0 0.0
        %726 = vmatpush1.msra.mxu0 0.0
        %727 = vmatprep.subr.mxu0 0.0
        %728 = vmatpush1.msra.mxu0 0.0
        %729 = vmatprep.subr.mxu0 0.0
        %730 = vmatpush1.msra.mxu0 0.0
        %731 = vmatprep.subr.mxu0 0.0
        %732 = vmatpush1.msra.mxu0 0.0
        %733 = vmatprep.subr.mxu0 0.0
        %734 = vmatpush1.msra.mxu0 0.0
        %735 = vmatprep.subr.mxu0 0.0
        %736 = vmatpush1.msra.mxu0 0.0
        %737 = vmatprep.subr.mxu0 0.0
        %738 = vmatpush1.msra.mxu0 0.0
        %739 = vmatprep.subr.mxu0 0.0
        %740 = vmatpush1.msra.mxu0 0.0
        %741 = vmatprep.subr.mxu0 0.0
        %742 = vmatpush1.msra.mxu0 0.0
        %743 = vmatprep.subr.mxu0 0.0
        %744 = vmatpush1.msra.mxu0 0.0
        %745 = vmatprep.subr.mxu0 0.0
        %746 = vmatpush1.msra.mxu0 0.0
        %747 = vmatprep.subr.mxu0 0.0
        %748 = vmatpush1.msra.mxu0 0.0
        %749 = vmatprep.subr.mxu0 0.0
        %750 = vmatpush1.msra.mxu0 0.0
        %751 = vmatprep.mubr.f32.mxu0 0.0
        %752 = vmatmul.mubr.f32.gmra.mrb[0].mxu0 %v621
        %v753 = vpop.f32.mrb[0].mxu0
        %v754 = vadd.f32 %v675, %v753
        %v755 = vpop.f32.mrb[0].mxu0
        %v756 = vadd.f32 %v679, %v755
        %757 = vdwg.mxu0
        %758 = vmatprep.subr.mxu0 0.0
        %759 = vmatpush1.msra.mxu0 %v624
        %760 = vmatprep.subr.mxu0 0.0
        %761 = vmatpush1.msra.mxu0 %v627
        %762 = vmatprep.subr.mxu0 0.0
        %763 = vmatpush1.msra.mxu0 %v630
        %764 = vmatprep.subr.mxu0 0.0
        %765 = vmatpush1.msra.mxu0 %v633
        %766 = vmatprep.subr.mxu0 0.0
        %767 = vmatpush1.msra.mxu0 %v636
        %768 = vmatprep.subr.mxu0 0.0
        %769 = vmatpush1.msra.mxu0 %v639
        %770 = vmatprep.subr.mxu0 0.0
        %771 = vmatpush1.msra.mxu0 %v642
        %772 = vmatprep.subr.mxu0 0.0
        %773 = vmatpush1.msra.mxu0 %v645
        %774 = vmatprep.subr.mxu0 0.0
        %775 = vmatpush1.msra.mxu0 %v648
        %776 = vmatprep.subr.mxu0 0.0
        %777 = vmatpush1.msra.mxu0 %v651
        %778 = vmatprep.subr.mxu0 0.0
        %779 = vmatpush1.msra.mxu0 %v654
        %780 = vmatprep.subr.mxu0 0.0
        %781 = vmatpush1.msra.mxu0 %v657
        %782 = vmatprep.subr.mxu0 0.0
        %783 = vmatpush1.msra.mxu0 %v660
        %784 = vmatprep.subr.mxu0 0.0
        %785 = vmatpush1.msra.mxu0 %v663
        %786 = vmatprep.subr.mxu0 0.0
        %787 = vmatpush1.msra.mxu0 %v666
        %788 = vmatprep.subr.mxu0 0.0
        %789 = vmatpush1.msra.mxu0 %v669
        %790 = vmatprep.subr.mxu0 0.0
        %791 = vmatpush1.msra.mxu0 0.0
        %792 = vmatprep.subr.mxu0 0.0
        %793 = vmatpush1.msra.mxu0 0.0
        %794 = vmatprep.subr.mxu0 0.0
        %795 = vmatpush1.msra.mxu0 0.0
        %796 = vmatprep.subr.mxu0 0.0
        %797 = vmatpush1.msra.mxu0 0.0
        %798 = vmatprep.subr.mxu0 0.0
        %799 = vmatpush1.msra.mxu0 0.0
        %800 = vmatprep.subr.mxu0 0.0
        %801 = vmatpush1.msra.mxu0 0.0
        %802 = vmatprep.subr.mxu0 0.0
        %803 = vmatpush1.msra.mxu0 0.0
        %804 = vmatprep.subr.mxu0 0.0
        %805 = vmatpush1.msra.mxu0 0.0
        %806 = vmatprep.subr.mxu0 0.0
        %807 = vmatpush1.msra.mxu0 0.0
        %808 = vmatprep.subr.mxu0 0.0
        %809 = vmatpush1.msra.mxu0 0.0
        %810 = vmatprep.subr.mxu0 0.0
        %811 = vmatpush1.msra.mxu0 0.0
        %812 = vmatprep.subr.mxu0 0.0
        %813 = vmatpush1.msra.mxu0 0.0
        %814 = vmatprep.subr.mxu0 0.0
        %815 = vmatpush1.msra.mxu0 0.0
        %816 = vmatprep.subr.mxu0 0.0
        %817 = vmatpush1.msra.mxu0 0.0
        %818 = vmatprep.subr.mxu0 0.0
        %819 = vmatpush1.msra.mxu0 0.0
        %820 = vmatprep.subr.mxu0 0.0
        %821 = vmatpush1.msra.mxu0 0.0
        %822 = vmatprep.mubr.f32.mxu0 0.0
        %823 = vmatmul.mubr.f32.gmra.mrb[0].mxu0 %v621
        %v824 = vpop.f32.mrb[0].mxu0
        %v825 = vadd.f32 %v683, %v824
        %v826 = vpop.f32.mrb[0].mxu0
        %827 = vdwg.mxu0
        %v828 = vmul.f32 %v754, 0.17677669
        %vm829 = vcmask 261120
        %v831 = vsel %vm829, %v828, 0
        %v834 = vsel %vm829, %v756, 0
        %836 = vmatprep.subr.mxu0 0.0
        %837 = vmatpush1.xpose.msra.mxu0 %v834
        %838 = vmatprep.subr.mxu0 0.0
        %839 = vmatpush1.xpose.msra.mxu0 0.0
        %840 = vmatprep.subr.mxu0 0.0
        %841 = vmatpush1.xpose.msra.mxu0 0.0
        %842 = vmatprep.subr.mxu0 0.0
        %843 = vmatpush1.xpose.msra.mxu0 0.0
        %844 = vmatprep.subr.mxu0 0.0
        %845 = vmatpush1.xpose.msra.mxu0 0.0
        %846 = vmatprep.subr.mxu0 0.0
        %847 = vmatpush1.xpose.msra.mxu0 0.0
        %848 = vmatprep.subr.mxu0 0.0
        %849 = vmatpush1.xpose.msra.mxu0 0.0
        %850 = vmatprep.subr.mxu0 0.0
        %851 = vmatpush1.xpose.msra.mxu0 0.0
        %852 = vmatprep.subr.mxu0 0.0
        %853 = vmatpush1.xpose.msra.mxu0 0.0
        %854 = vmatprep.subr.mxu0 0.0
        %855 = vmatpush1.xpose.msra.mxu0 0.0
        %856 = vmatprep.subr.mxu0 0.0
        %857 = vmatpush1.xpose.msra.mxu0 0.0
        %858 = vmatprep.subr.mxu0 0.0
        %859 = vmatpush1.xpose.msra.mxu0 0.0
        %860 = vmatprep.subr.mxu0 0.0
        %861 = vmatpush1.xpose.msra.mxu0 0.0
        %862 = vmatprep.subr.mxu0 0.0
        %863 = vmatpush1.xpose.msra.mxu0 0.0
        %864 = vmatprep.subr.mxu0 0.0
        %865 = vmatpush1.xpose.msra.mxu0 0.0
        %866 = vmatprep.subr.mxu0 0.0
        %867 = vmatpush1.xpose.msra.mxu0 0.0
        %868 = vmatprep.subr.mxu0 0.0
        %869 = vmatpush1.xpose.msra.mxu0 0.0
        %870 = vmatprep.subr.mxu0 0.0
        %871 = vmatpush1.xpose.msra.mxu0 0.0
        %872 = vmatprep.subr.mxu0 0.0
        %873 = vmatpush1.xpose.msra.mxu0 0.0
        %874 = vmatprep.subr.mxu0 0.0
        %875 = vmatpush1.xpose.msra.mxu0 0.0
        %876 = vmatprep.subr.mxu0 0.0
        %877 = vmatpush1.xpose.msra.mxu0 0.0
        %878 = vmatprep.subr.mxu0 0.0
        %879 = vmatpush1.xpose.msra.mxu0 0.0
        %880 = vmatprep.subr.mxu0 0.0
        %881 = vmatpush1.xpose.msra.mxu0 0.0
        %882 = vmatprep.subr.mxu0 0.0
        %883 = vmatpush1.xpose.msra.mxu0 0.0
        %884 = vmatprep.subr.mxu0 0.0
        %885 = vmatpush1.xpose.msra.mxu0 0.0
        %886 = vmatprep.subr.mxu0 0.0
        %887 = vmatpush1.xpose.msra.mxu0 0.0
        %888 = vmatprep.subr.mxu0 0.0
        %889 = vmatpush1.xpose.msra.mxu0 0.0
        %890 = vmatprep.subr.mxu0 0.0
        %891 = vmatpush1.xpose.msra.mxu0 0.0
        %892 = vmatprep.subr.mxu0 0.0
        %893 = vmatpush1.xpose.msra.mxu0 0.0
        %894 = vmatprep.subr.mxu0 0.0
        %895 = vmatpush1.xpose.msra.mxu0 0.0
        %896 = vmatprep.subr.mxu0 0.0
        %897 = vmatpush1.xpose.msra.mxu0 0.0
        %898 = vmatprep.subr.mxu0 0.0
        %899 = vmatpush1.xpose.msra.mxu0 0.0
        %900 = vmatprep.mubr.f32.mxu0 0.0
        %901 = vmatmul.mubr.f32.gmra.mrb[0].mxu0 %v831
        %v902 = vpop.f32.mrb[0].mxu0
        %v903 = vadd.f32 0.0, %v902
        %v904 = vpop.f32.mrb[0].mxu0
        %905 = vdwg.mxu0
        %vm906 = vcmask 64512
        %v907 = vsel %vm906, %v903, -inf
        %908 = vmax.xlane.f32.xlu0 %v907
        %v909 = vpop.xlane.xlu0 %908
        %v910 = vsub.f32 %v903, %v909
        %v911 = vmul.f32 %v910, 1.442695
        %v912 = vpow.pop %v911
        %v913 = vsel %vm906, %v912, 0.0
        %914 = vadd.xlane.f32.xlu0 %v913
        %v915 = vpop.xlane.xlu0 %914
        %v916 = vrcp.pop %v915
        %v917 = vmul.f32 %v912, %v916
        %v919 = vsel %vm906, %v917, 0
        %921 = vmatprep.subr.mxu0 0.0
        %922 = vmatpush1.msra.mxu0 %v825
        %923 = vmatprep.subr.mxu0 0.0
        %924 = vmatpush1.msra.mxu0 0.0
        %925 = vmatprep.subr.mxu0 0.0
        %926 = vmatpush1.msra.mxu0 0.0
        %927 = vmatprep.subr.mxu0 0.0
        %928 = vmatpush1.msra.mxu0 0.0
        %929 = vmatprep.subr.mxu0 0.0
        %930 = vmatpush1.msra.mxu0 0.0
        %931 = vmatprep.subr.mxu0 0.0
        %932 = vmatpush1.msra.mxu0 0.0
        %933 = vmatprep.subr.mxu0 0.0
        %934 = vmatpush1.msra.mxu0 0.0
        %935 = vmatprep.subr.mxu0 0.0
        %936 = vmatpush1.msra.mxu0 0.0
        %937 = vmatprep.subr.mxu0 0.0
        %938 = vmatpush1.msra.mxu0 0.0
        %939 = vmatprep.subr.mxu0 0.0
        %940 = vmatpush1.msra.mxu0 0.0
        %941 = vmatprep.subr.mxu0 0.0
        %942 = vmatpush1.msra.mxu0 0.0
        %943 = vmatprep.subr.mxu0 0.0
        %944 = vmatpush1.msra.mxu0 0.0
        %945 = vmatprep.subr.mxu0 0.0
        %946 = vmatpush1.msra.mxu0 0.0
        %947 = vmatprep.subr.mxu0 0.0
        %948 = vmatpush1.msra.mxu0 0.0
        %949 = vmatprep.subr.mxu0 0.0
        %950 = vmatpush1.msra.mxu0 0.0
        %951 = vmatprep.subr.mxu0 0.0
        %952 = vmatpush1.msra.mxu0 0.0
        %953 = vmatprep.subr.mxu0 0.0
        %954 = vmatpush1.msra.mxu0 0.0
        %955 = vmatprep.subr.mxu0 0.0
        %956 = vmatpush1.msra.mxu0 0.0
        %957 = vmatprep.subr.mxu0 0.0
        %958 = vmatpush1.msra.mxu0 0.0
        %959 = vmatprep.subr.mxu0 0.0
        %960 = vmatpush1.msra.mxu0 0.0
        %961 = vmatprep.subr.mxu0 0.0
        %962 = vmatpush1.msra.mxu0 0.0
        %963 = vmatprep.subr.mxu0 0.0
        %964 = vmatpush1.msra.mxu0 0.0
        %965 = vmatprep.subr.mxu0 0.0
        %966 = vmatpush1.msra.mxu0 0.0
        %967 = vmatprep.subr.mxu0 0.0
        %968 = vmatpush1.msra.mxu0 0.0
        %969 = vmatprep.subr.mxu0 0.0
        %970 = vmatpush1.msra.mxu0 0.0
        %971 = vmatprep.subr.mxu0 0.0
        %972 = vmatpush1.msra.mxu0 0.0
        %973 = vmatprep.subr.mxu0 0.0
        %974 = vmatpush1.msra.mxu0 0.0
        %975 = vmatprep.subr.mxu0 0.0
        %976 = vmatpush1.msra.mxu0 0.0
        %977 = vmatprep.subr.mxu0 0.0
        %978 = vmatpush1.msra.mxu0 0.0
        %979 = vmatprep.subr.mxu0 0.0
        %980 = vmatpush1.msra.mxu0 0.0
        %981 = vmatprep.subr.mxu0 0.0
        %982 = vmatpush1.msra.mxu0 0.0
        %983 = vmatprep.subr.mxu0 0.0
        %984 = vmatpush1.msra.mxu0 0.0
        %985 = vmatprep.mubr.f32.mxu0 0.0
        %986 = vmatmul.mubr.f32.gmra.mrb[0].mxu0 %v919
        %v987 = vpop.f32.mrb[0].mxu0
        %v988 = vadd.f32 0.0, %v987
        %v989 = vpop.f32.mrb[0].mxu0
        %990 = vdwg.mxu0
        %v991 = vld [vmem:[#allocation10] sm:$0xff]
        %v992 = vld [vmem:[#allocation10 + $0x8] sm:$0xff]
        %v993 = vld [vmem:[#allocation10 + $0x10] sm:$0xff]
        %v994 = vld [vmem:[#allocation10 + $0x18] sm:$0xff]
        %995 = vrot.lane.b32.xlu0 %v828, 96
        %v996 = vpop.permute.xlu0 %995
        %997 = vrot.lane.b32.xlu0 %v756, 96
        %v998 = vpop.permute.xlu0 %997
        %v999 = vsel %vm829, %v996, 0
        %v1001 = vsel %vm829, %v998, 0
        %1003 = vmatprep.subr.mxu0 0.0
        %1004 = vmatpush1.xpose.msra.mxu0 %v1001
        %1005 = vmatprep.subr.mxu0 0.0
        %1006 = vmatpush1.xpose.msra.mxu0 0.0
        %1007 = vmatprep.subr.mxu0 0.0
        %1008 = vmatpush1.xpose.msra.mxu0 0.0
        %1009 = vmatprep.subr.mxu0 0.0
        %1010 = vmatpush1.xpose.msra.mxu0 0.0
        %1011 = vmatprep.subr.mxu0 0.0
        %1012 = vmatpush1.xpose.msra.mxu0 0.0
        %1013 = vmatprep.subr.mxu0 0.0
        %1014 = vmatpush1.xpose.msra.mxu0 0.0
        %1015 = vmatprep.subr.mxu0 0.0
        %1016 = vmatpush1.xpose.msra.mxu0 0.0
        %1017 = vmatprep.subr.mxu0 0.0
        %1018 = vmatpush1.xpose.msra.mxu0 0.0
        %1019 = vmatprep.subr.mxu0 0.0
        %1020 = vmatpush1.xpose.msra.mxu0 0.0
        %1021 = vmatprep.subr.mxu0 0.0
        %1022 = vmatpush1.xpose.msra.mxu0 0.0
        %1023 = vmatprep.subr.mxu0 0.0
        %1024 = vmatpush1.xpose.msra.mxu0 0.0
        %1025 = vmatprep.subr.mxu0 0.0
        %1026 = vmatpush1.xpose.msra.mxu0 0.0
        %1027 = vmatprep.subr.mxu0 0.0
        %1028 = vmatpush1.xpose.msra.mxu0 0.0
        %1029 = vmatprep.subr.mxu0 0.0
        %1030 = vmatpush1.xpose.msra.mxu0 0.0
        %1031 = vmatprep.subr.mxu0 0.0
        %1032 = vmatpush1.xpose.msra.mxu0 0.0
        %1033 = vmatprep.subr.mxu0 0.0
        %1034 = vmatpush1.xpose.msra.mxu0 0.0
        %1035 = vmatprep.subr.mxu0 0.0
        %1036 = vmatpush1.xpose.msra.mxu0 0.0
        %1037 = vmatprep.subr.mxu0 0.0
        %1038 = vmatpush1.xpose.msra.mxu0 0.0
        %1039 = vmatprep.subr.mxu0 0.0
        %1040 = vmatpush1.xpose.msra.mxu0 0.0
        %1041 = vmatprep.subr.mxu0 0.0
        %1042 = vmatpush1.xpose.msra.mxu0 0.0
        %1043 = vmatprep.subr.mxu0 0.0
        %1044 = vmatpush1.xpose.msra.mxu0 0.0
        %1045 = vmatprep.subr.mxu0 0.0
        %1046 = vmatpush1.xpose.msra.mxu0 0.0
        %1047 = vmatprep.subr.mxu0 0.0
        %1048 = vmatpush1.xpose.msra.mxu0 0.0
        %1049 = vmatprep.subr.mxu0 0.0
        %1050 = vmatpush1.xpose.msra.mxu0 0.0
        %1051 = vmatprep.subr.mxu0 0.0
        %1052 = vmatpush1.xpose.msra.mxu0 0.0
        %1053 = vmatprep.subr.mxu0 0.0
        %1054 = vmatpush1.xpose.msra.mxu0 0.0
        %1055 = vmatprep.subr.mxu0 0.0
        %1056 = vmatpush1.xpose.msra.mxu0 0.0
        %1057 = vmatprep.subr.mxu0 0.0
        %1058 = vmatpush1.xpose.msra.mxu0 0.0
        %1059 = vmatprep.subr.mxu0 0.0
        %1060 = vmatpush1.xpose.msra.mxu0 0.0
        %1061 = vmatprep.subr.mxu0 0.0
        %1062 = vmatpush1.xpose.msra.mxu0 0.0
        %1063 = vmatprep.subr.mxu0 0.0
        %1064 = vmatpush1.xpose.msra.mxu0 0.0
        %1065 = vmatprep.subr.mxu0 0.0
        %1066 = vmatpush1.xpose.msra.mxu0 0.0
        %1067 = vmatprep.mubr.f32.mxu0 0.0
        %1068 = vmatmul.mubr.f32.gmra.mrb[0].mxu0 %v999
        %v1069 = vpop.f32.mrb[0].mxu0
        %v1070 = vadd.f32 0.0, %v1069
        %v1071 = vpop.f32.mrb[0].mxu0
        %1072 = vdwg.mxu0
        %v1073 = vsel %vm906, %v1070, -inf
        %1074 = vmax.xlane.f32.xlu0 %v1073
        %v1075 = vpop.xlane.xlu0 %1074
        %v1076 = vsub.f32 %v1070, %v1075
        %v1077 = vmul.f32 %v1076, 1.442695
        %v1078 = vpow.pop %v1077
        %v1079 = vsel %vm906, %v1078, 0.0
        %1080 = vadd.xlane.f32.xlu0 %v1079
        %v1081 = vpop.xlane.xlu0 %1080
        %v1082 = vrcp.pop %v1081
        %v1083 = vmul.f32 %v1078, %v1082
        %1085 = vrot.lane.b32.xlu0 %v825, 96
        %v1086 = vpop.permute.xlu0 %1085
        %v1089 = vsel %vm906, %v1083, 0
        %1091 = vmatprep.subr.mxu0 0.0
        %1092 = vmatpush1.msra.mxu0 %v1086
        %1093 = vmatprep.subr.mxu0 0.0
        %1094 = vmatpush1.msra.mxu0 0.0
        %1095 = vmatprep.subr.mxu0 0.0
        %1096 = vmatpush1.msra.mxu0 0.0
        %1097 = vmatprep.subr.mxu0 0.0
        %1098 = vmatpush1.msra.mxu0 0.0
        %1099 = vmatprep.subr.mxu0 0.0
        %1100 = vmatpush1.msra.mxu0 0.0
        %1101 = vmatprep.subr.mxu0 0.0
        %1102 = vmatpush1.msra.mxu0 0.0
        %1103 = vmatprep.subr.mxu0 0.0
        %1104 = vmatpush1.msra.mxu0 0.0
        %1105 = vmatprep.subr.mxu0 0.0
        %1106 = vmatpush1.msra.mxu0 0.0
        %1107 = vmatprep.subr.mxu0 0.0
        %1108 = vmatpush1.msra.mxu0 0.0
        %1109 = vmatprep.subr.mxu0 0.0
        %1110 = vmatpush1.msra.mxu0 0.0
        %1111 = vmatprep.subr.mxu0 0.0
        %1112 = vmatpush1.msra.mxu0 0.0
        %1113 = vmatprep.subr.mxu0 0.0
        %1114 = vmatpush1.msra.mxu0 0.0
        %1115 = vmatprep.subr.mxu0 0.0
        %1116 = vmatpush1.msra.mxu0 0.0
        %1117 = vmatprep.subr.mxu0 0.0
        %1118 = vmatpush1.msra.mxu0 0.0
        %1119 = vmatprep.subr.mxu0 0.0
        %1120 = vmatpush1.msra.mxu0 0.0
        %1121 = vmatprep.subr.mxu0 0.0
        %1122 = vmatpush1.msra.mxu0 0.0
        %1123 = vmatprep.subr.mxu0 0.0
        %1124 = vmatpush1.msra.mxu0 0.0
        %1125 = vmatprep.subr.mxu0 0.0
        %1126 = vmatpush1.msra.mxu0 0.0
        %1127 = vmatprep.subr.mxu0 0.0
        %1128 = vmatpush1.msra.mxu0 0.0
        %1129 = vmatprep.subr.mxu0 0.0
        %1130 = vmatpush1.msra.mxu0 0.0
        %1131 = vmatprep.subr.mxu0 0.0
        %1132 = vmatpush1.msra.mxu0 0.0
        %1133 = vmatprep.subr.mxu0 0.0
        %1134 = vmatpush1.msra.mxu0 0.0
        %1135 = vmatprep.subr.mxu0 0.0
        %1136 = vmatpush1.msra.mxu0 0.0
        %1137 = vmatprep.subr.mxu0 0.0
        %1138 = vmatpush1.msra.mxu0 0.0
        %1139 = vmatprep.subr.mxu0 0.0
        %1140 = vmatpush1.msra.mxu0 0.0
        %1141 = vmatprep.subr.mxu0 0.0
        %1142 = vmatpush1.msra.mxu0 0.0
        %1143 = vmatprep.subr.mxu0 0.0
        %1144 = vmatpush1.msra.mxu0 0.0
        %1145 = vmatprep.subr.mxu0 0.0
        %1146 = vmatpush1.msra.mxu0 0.0
        %1147 = vmatprep.subr.mxu0 0.0
        %1148 = vmatpush1.msra.mxu0 0.0
        %1149 = vmatprep.subr.mxu0 0.0
        %1150 = vmatpush1.msra.mxu0 0.0
        %1151 = vmatprep.subr.mxu0 0.0
        %1152 = vmatpush1.msra.mxu0 0.0
        %1153 = vmatprep.subr.mxu0 0.0
        %1154 = vmatpush1.msra.mxu0 0.0
        %1155 = vmatprep.mubr.f32.mxu0 0.0
        %1156 = vmatmul.mubr.f32.gmra.mrb[0].mxu0 %v1089
        %v1157 = vpop.f32.mrb[0].mxu0
        %v1158 = vadd.f32 0.0, %v1157
        %v1159 = vpop.f32.mrb[0].mxu0
        %1160 = vdwg.mxu0
        %v1161 = vld [vmem:[#allocation10 + $0x20] sm:$0xff]
        %v1162 = vld [vmem:[#allocation10 + $0x28] sm:$0xff]
        %v1163 = vld [vmem:[#allocation10 + $0x30] sm:$0xff]
        %v1164 = vld [vmem:[#allocation10 + $0x38] sm:$0xff]
        %v1166 = vsel %vm829, %v1158, 0
        %1168 = vmatprep.subr.mxu0 0.0
        %1169 = vmatpush1.msra.mxu0 %v1161
        %1170 = vmatprep.subr.mxu0 0.0
        %1171 = vmatpush1.msra.mxu0 %v1162
        %1172 = vmatprep.subr.mxu0 0.0
        %1173 = vmatpush1.msra.mxu0 %v1163
        %1174 = vmatprep.subr.mxu0 0.0
        %1175 = vmatpush1.msra.mxu0 %v1164
        %1176 = vmatprep.subr.mxu0 0.0
        %1177 = vmatpush1.msra.mxu0 0.0
        %1178 = vmatprep.subr.mxu0 0.0
        %1179 = vmatpush1.msra.mxu0 0.0
        %1180 = vmatprep.subr.mxu0 0.0
        %1181 = vmatpush1.msra.mxu0 0.0
        %1182 = vmatprep.subr.mxu0 0.0
        %1183 = vmatpush1.msra.mxu0 0.0
        %1184 = vmatprep.subr.mxu0 0.0
        %1185 = vmatpush1.msra.mxu0 0.0
        %1186 = vmatprep.subr.mxu0 0.0
        %1187 = vmatpush1.msra.mxu0 0.0
        %1188 = vmatprep.subr.mxu0 0.0
        %1189 = vmatpush1.msra.mxu0 0.0
        %1190 = vmatprep.subr.mxu0 0.0
        %1191 = vmatpush1.msra.mxu0 0.0
        %1192 = vmatprep.subr.mxu0 0.0
        %1193 = vmatpush1.msra.mxu0 0.0
        %1194 = vmatprep.subr.mxu0 0.0
        %1195 = vmatpush1.msra.mxu0 0.0
        %1196 = vmatprep.subr.mxu0 0.0
        %1197 = vmatpush1.msra.mxu0 0.0
        %1198 = vmatprep.subr.mxu0 0.0
        %1199 = vmatpush1.msra.mxu0 0.0
        %1200 = vmatprep.subr.mxu0 0.0
        %1201 = vmatpush1.msra.mxu0 0.0
        %1202 = vmatprep.subr.mxu0 0.0
        %1203 = vmatpush1.msra.mxu0 0.0
        %1204 = vmatprep.subr.mxu0 0.0
        %1205 = vmatpush1.msra.mxu0 0.0
        %1206 = vmatprep.subr.mxu0 0.0
        %1207 = vmatpush1.msra.mxu0 0.0
        %1208 = vmatprep.subr.mxu0 0.0
        %1209 = vmatpush1.msra.mxu0 0.0
        %1210 = vmatprep.subr.mxu0 0.0
        %1211 = vmatpush1.msra.mxu0 0.0
        %1212 = vmatprep.subr.mxu0 0.0
        %1213 = vmatpush1.msra.mxu0 0.0
        %1214 = vmatprep.subr.mxu0 0.0
        %1215 = vmatpush1.msra.mxu0 0.0
        %1216 = vmatprep.subr.mxu0 0.0
        %1217 = vmatpush1.msra.mxu0 0.0
        %1218 = vmatprep.subr.mxu0 0.0
        %1219 = vmatpush1.msra.mxu0 0.0
        %1220 = vmatprep.subr.mxu0 0.0
        %1221 = vmatpush1.msra.mxu0 0.0
        %1222 = vmatprep.subr.mxu0 0.0
        %1223 = vmatpush1.msra.mxu0 0.0
        %1224 = vmatprep.subr.mxu0 0.0
        %1225 = vmatpush1.msra.mxu0 0.0
        %1226 = vmatprep.subr.mxu0 0.0
        %1227 = vmatpush1.msra.mxu0 0.0
        %1228 = vmatprep.subr.mxu0 0.0
        %1229 = vmatpush1.msra.mxu0 0.0
        %1230 = vmatprep.subr.mxu0 0.0
        %1231 = vmatpush1.msra.mxu0 0.0
        %1232 = vmatprep.mubr.f32.mxu0 0.0
        %1233 = vmatmul.mubr.f32.gmra.mrb[0].mxu0 %v1166
        %v1234 = vpop.f32.mrb[0].mxu0
        %v1235 = vadd.f32 0.0, %v1234
        %v1236 = vpop.f32.mrb[0].mxu0
        %1237 = vdwg.mxu0
        %v1239 = vsel %vm829, %v988, 0
        %1241 = vmatprep.subr.mxu0 0.0
        %1242 = vmatpush1.msra.mxu0 %v991
        %1243 = vmatprep.subr.mxu0 0.0
        %1244 = vmatpush1.msra.mxu0 %v992
        %1245 = vmatprep.subr.mxu0 0.0
        %1246 = vmatpush1.msra.mxu0 %v993
        %1247 = vmatprep.subr.mxu0 0.0
        %1248 = vmatpush1.msra.mxu0 %v994
        %1249 = vmatprep.subr.mxu0 0.0
        %1250 = vmatpush1.msra.mxu0 0.0
        %1251 = vmatprep.subr.mxu0 0.0
        %1252 = vmatpush1.msra.mxu0 0.0
        %1253 = vmatprep.subr.mxu0 0.0
        %1254 = vmatpush1.msra.mxu0 0.0
        %1255 = vmatprep.subr.mxu0 0.0
        %1256 = vmatpush1.msra.mxu0 0.0
        %1257 = vmatprep.subr.mxu0 0.0
        %1258 = vmatpush1.msra.mxu0 0.0
        %1259 = vmatprep.subr.mxu0 0.0
        %1260 = vmatpush1.msra.mxu0 0.0
        %1261 = vmatprep.subr.mxu0 0.0
        %1262 = vmatpush1.msra.mxu0 0.0
        %1263 = vmatprep.subr.mxu0 0.0
        %1264 = vmatpush1.msra.mxu0 0.0
        %1265 = vmatprep.subr.mxu0 0.0
        %1266 = vmatpush1.msra.mxu0 0.0
        %1267 = vmatprep.subr.mxu0 0.0
        %1268 = vmatpush1.msra.mxu0 0.0
        %1269 = vmatprep.subr.mxu0 0.0
        %1270 = vmatpush1.msra.mxu0 0.0
        %1271 = vmatprep.subr.mxu0 0.0
        %1272 = vmatpush1.msra.mxu0 0.0
        %1273 = vmatprep.subr.mxu0 0.0
        %1274 = vmatpush1.msra.mxu0 0.0
        %1275 = vmatprep.subr.mxu0 0.0
        %1276 = vmatpush1.msra.mxu0 0.0
        %1277 = vmatprep.subr.mxu0 0.0
        %1278 = vmatpush1.msra.mxu0 0.0
        %1279 = vmatprep.subr.mxu0 0.0
        %1280 = vmatpush1.msra.mxu0 0.0
        %1281 = vmatprep.subr.mxu0 0.0
        %1282 = vmatpush1.msra.mxu0 0.0
        %1283 = vmatprep.subr.mxu0 0.0
        %1284 = vmatpush1.msra.mxu0 0.0
        %1285 = vmatprep.subr.mxu0 0.0
        %1286 = vmatpush1.msra.mxu0 0.0
        %1287 = vmatprep.subr.mxu0 0.0
        %1288 = vmatpush1.msra.mxu0 0.0
        %1289 = vmatprep.subr.mxu0 0.0
        %1290 = vmatpush1.msra.mxu0 0.0
        %1291 = vmatprep.subr.mxu0 0.0
        %1292 = vmatpush1.msra.mxu0 0.0
        %1293 = vmatprep.subr.mxu0 0.0
        %1294 = vmatpush1.msra.mxu0 0.0
        %1295 = vmatprep.subr.mxu0 0.0
        %1296 = vmatpush1.msra.mxu0 0.0
        %1297 = vmatprep.subr.mxu0 0.0
        %1298 = vmatpush1.msra.mxu0 0.0
        %1299 = vmatprep.subr.mxu0 0.0
        %1300 = vmatpush1.msra.mxu0 0.0
        %1301 = vmatprep.subr.mxu0 0.0
        %1302 = vmatpush1.msra.mxu0 0.0
        %1303 = vmatprep.subr.mxu0 0.0
        %1304 = vmatpush1.msra.mxu0 0.0
        %1305 = vmatprep.mubr.f32.mxu0 0.0
        %1306 = vmatmul.mubr.f32.gmra.mrb[0].mxu0 %v1239
        %v1307 = vpop.f32.mrb[0].mxu0
        %v1308 = vadd.f32 %v1235, %v1307
        %v1309 = vpop.f32.mrb[0].mxu0
        %1310 = vdwg.mxu0
        %1311 = vrot.lane.b32.xlu0 %v828, 64
        %v1312 = vpop.permute.xlu0 %1311
        %1313 = vrot.lane.b32.xlu0 %v756, 64
        %v1314 = vpop.permute.xlu0 %1313
        %v1315 = vsel %vm829, %v1312, 0
        %v1317 = vsel %vm829, %v1314, 0
        %1319 = vmatprep.subr.mxu0 0.0
        %1320 = vmatpush1.xpose.msra.mxu0 %v1317
        %1321 = vmatprep.subr.mxu0 0.0
        %1322 = vmatpush1.xpose.msra.mxu0 0.0
        %1323 = vmatprep.subr.mxu0 0.0
        %1324 = vmatpush1.xpose.msra.mxu0 0.0
        %1325 = vmatprep.subr.mxu0 0.0
        %1326 = vmatpush1.xpose.msra.mxu0 0.0
        %1327 = vmatprep.subr.mxu0 0.0
        %1328 = vmatpush1.xpose.msra.mxu0 0.0
        %1329 = vmatprep.subr.mxu0 0.0
        %1330 = vmatpush1.xpose.msra.mxu0 0.0
        %1331 = vmatprep.subr.mxu0 0.0
        %1332 = vmatpush1.xpose.msra.mxu0 0.0
        %1333 = vmatprep.subr.mxu0 0.0
        %1334 = vmatpush1.xpose.msra.mxu0 0.0
        %1335 = vmatprep.subr.mxu0 0.0
        %1336 = vmatpush1.xpose.msra.mxu0 0.0
        %1337 = vmatprep.subr.mxu0 0.0
        %1338 = vmatpush1.xpose.msra.mxu0 0.0
        %1339 = vmatprep.subr.mxu0 0.0
        %1340 = vmatpush1.xpose.msra.mxu0 0.0
        %1341 = vmatprep.subr.mxu0 0.0
        %1342 = vmatpush1.xpose.msra.mxu0 0.0
        %1343 = vmatprep.subr.mxu0 0.0
        %1344 = vmatpush1.xpose.msra.mxu0 0.0
        %1345 = vmatprep.subr.mxu0 0.0
        %1346 = vmatpush1.xpose.msra.mxu0 0.0
        %1347 = vmatprep.subr.mxu0 0.0
        %1348 = vmatpush1.xpose.msra.mxu0 0.0
        %1349 = vmatprep.subr.mxu0 0.0
        %1350 = vmatpush1.xpose.msra.mxu0 0.0
        %1351 = vmatprep.subr.mxu0 0.0
        %1352 = vmatpush1.xpose.msra.mxu0 0.0
        %1353 = vmatprep.subr.mxu0 0.0
        %1354 = vmatpush1.xpose.msra.mxu0 0.0
        %1355 = vmatprep.subr.mxu0 0.0
        %1356 = vmatpush1.xpose.msra.mxu0 0.0
        %1357 = vmatprep.subr.mxu0 0.0
        %1358 = vmatpush1.xpose.msra.mxu0 0.0
        %1359 = vmatprep.subr.mxu0 0.0
        %1360 = vmatpush1.xpose.msra.mxu0 0.0
        %1361 = vmatprep.subr.mxu0 0.0
        %1362 = vmatpush1.xpose.msra.mxu0 0.0
        %1363 = vmatprep.subr.mxu0 0.0
        %1364 = vmatpush1.xpose.msra.mxu0 0.0
        %1365 = vmatprep.subr.mxu0 0.0
        %1366 = vmatpush1.xpose.msra.mxu0 0.0
        %1367 = vmatprep.subr.mxu0 0.0
        %1368 = vmatpush1.xpose.msra.mxu0 0.0
        %1369 = vmatprep.subr.mxu0 0.0
        %1370 = vmatpush1.xpose.msra.mxu0 0.0
        %1371 = vmatprep.subr.mxu0 0.0
        %1372 = vmatpush1.xpose.msra.mxu0 0.0
        %1373 = vmatprep.subr.mxu0 0.0
        %1374 = vmatpush1.xpose.msra.mxu0 0.0
        %1375 = vmatprep.subr.mxu0 0.0
        %1376 = vmatpush1.xpose.msra.mxu0 0.0
        %1377 = vmatprep.subr.mxu0 0.0
        %1378 = vmatpush1.xpose.msra.mxu0 0.0
        %1379 = vmatprep.subr.mxu0 0.0
        %1380 = vmatpush1.xpose.msra.mxu0 0.0
        %1381 = vmatprep.subr.mxu0 0.0
        %1382 = vmatpush1.xpose.msra.mxu0 0.0
        %1383 = vmatprep.mubr.f32.mxu0 0.0
        %1384 = vmatmul.mubr.f32.gmra.mrb[0].mxu0 %v1315
        %v1385 = vpop.f32.mrb[0].mxu0
        %v1386 = vadd.f32 0.0, %v1385
        %v1387 = vpop.f32.mrb[0].mxu0
        %1388 = vdwg.mxu0
        %v1389 = vsel %vm906, %v1386, -inf
        %1390 = vmax.xlane.f32.xlu0 %v1389
        %v1391 = vpop.xlane.xlu0 %1390
        %v1392 = vsub.f32 %v1386, %v1391
        %v1393 = vmul.f32 %v1392, 1.442695
        %v1394 = vpow.pop %v1393
        %v1395 = vsel %vm906, %v1394, 0.0
        %1396 = vadd.xlane.f32.xlu0 %v1395
        %v1397 = vpop.xlane.xlu0 %1396
        %v1398 = vrcp.pop %v1397
        %v1399 = vmul.f32 %v1394, %v1398
        %1400 = vrot.lane.b32.xlu0 %v825, 64
        %v1401 = vpop.permute.xlu0 %1400
        %v1404 = vsel %vm906, %v1399, 0
        %1406 = vmatprep.subr.mxu0 0.0
        %1407 = vmatpush1.msra.mxu0 %v1401
        %1408 = vmatprep.subr.mxu0 0.0
        %1409 = vmatpush1.msra.mxu0 0.0
        %1410 = vmatprep.subr.mxu0 0.0
        %1411 = vmatpush1.msra.mxu0 0.0
        %1412 = vmatprep.subr.mxu0 0.0
        %1413 = vmatpush1.msra.mxu0 0.0
        %1414 = vmatprep.subr.mxu0 0.0
        %1415 = vmatpush1.msra.mxu0 0.0
        %1416 = vmatprep.subr.mxu0 0.0
        %1417 = vmatpush1.msra.mxu0 0.0
        %1418 = vmatprep.subr.mxu0 0.0
        %1419 = vmatpush1.msra.mxu0 0.0
        %1420 = vmatprep.subr.mxu0 0.0
        %1421 = vmatpush1.msra.mxu0 0.0
        %1422 = vmatprep.subr.mxu0 0.0
        %1423 = vmatpush1.msra.mxu0 0.0
        %1424 = vmatprep.subr.mxu0 0.0
        %1425 = vmatpush1.msra.mxu0 0.0
        %1426 = vmatprep.subr.mxu0 0.0
        %1427 = vmatpush1.msra.mxu0 0.0
        %1428 = vmatprep.subr.mxu0 0.0
        %1429 = vmatpush1.msra.mxu0 0.0
        %1430 = vmatprep.subr.mxu0 0.0
        %1431 = vmatpush1.msra.mxu0 0.0
        %1432 = vmatprep.subr.mxu0 0.0
        %1433 = vmatpush1.msra.mxu0 0.0
        %1434 = vmatprep.subr.mxu0 0.0
        %1435 = vmatpush1.msra.mxu0 0.0
        %1436 = vmatprep.subr.mxu0 0.0
        %1437 = vmatpush1.msra.mxu0 0.0
        %1438 = vmatprep.subr.mxu0 0.0
        %1439 = vmatpush1.msra.mxu0 0.0
        %1440 = vmatprep.subr.mxu0 0.0
        %1441 = vmatpush1.msra.mxu0 0.0
        %1442 = vmatprep.subr.mxu0 0.0
        %1443 = vmatpush1.msra.mxu0 0.0
        %1444 = vmatprep.subr.mxu0 0.0
        %1445 = vmatpush1.msra.mxu0 0.0
        %1446 = vmatprep.subr.mxu0 0.0
        %1447 = vmatpush1.msra.mxu0 0.0
        %1448 = vmatprep.subr.mxu0 0.0
        %1449 = vmatpush1.msra.mxu0 0.0
        %1450 = vmatprep.subr.mxu0 0.0
        %1451 = vmatpush1.msra.mxu0 0.0
        %1452 = vmatprep.subr.mxu0 0.0
        %1453 = vmatpush1.msra.mxu0 0.0
        %1454 = vmatprep.subr.mxu0 0.0
        %1455 = vmatpush1.msra.mxu0 0.0
        %1456 = vmatprep.subr.mxu0 0.0
        %1457 = vmatpush1.msra.mxu0 0.0
        %1458 = vmatprep.subr.mxu0 0.0
        %1459 = vmatpush1.msra.mxu0 0.0
        %1460 = vmatprep.subr.mxu0 0.0
        %1461 = vmatpush1.msra.mxu0 0.0
        %1462 = vmatprep.subr.mxu0 0.0
        %1463 = vmatpush1.msra.mxu0 0.0
        %1464 = vmatprep.subr.mxu0 0.0
        %1465 = vmatpush1.msra.mxu0 0.0
        %1466 = vmatprep.subr.mxu0 0.0
        %1467 = vmatpush1.msra.mxu0 0.0
        %1468 = vmatprep.subr.mxu0 0.0
        %1469 = vmatpush1.msra.mxu0 0.0
        %1470 = vmatprep.mubr.f32.mxu0 0.0
        %1471 = vmatmul.mubr.f32.gmra.mrb[0].mxu0 %v1404
        %v1472 = vpop.f32.mrb[0].mxu0
        %v1473 = vadd.f32 0.0, %v1472
        %v1474 = vpop.f32.mrb[0].mxu0
        %1475 = vdwg.mxu0
        %v1476 = vld [vmem:[#allocation10 + $0x40] sm:$0xff]
        %v1477 = vld [vmem:[#allocation10 + $0x48] sm:$0xff]
        %v1478 = vld [vmem:[#allocation10 + $0x50] sm:$0xff]
        %v1479 = vld [vmem:[#allocation10 + $0x58] sm:$0xff]
        %v1481 = vsel %vm829, %v1473, 0
        %1483 = vmatprep.subr.mxu0 0.0
        %1484 = vmatpush1.msra.mxu0 %v1476
        %1485 = vmatprep.subr.mxu0 0.0
        %1486 = vmatpush1.msra.mxu0 %v1477
        %1487 = vmatprep.subr.mxu0 0.0
        %1488 = vmatpush1.msra.mxu0 %v1478
        %1489 = vmatprep.subr.mxu0 0.0
        %1490 = vmatpush1.msra.mxu0 %v1479
        %1491 = vmatprep.subr.mxu0 0.0
        %1492 = vmatpush1.msra.mxu0 0.0
        %1493 = vmatprep.subr.mxu0 0.0
        %1494 = vmatpush1.msra.mxu0 0.0
        %1495 = vmatprep.subr.mxu0 0.0
        %1496 = vmatpush1.msra.mxu0 0.0
        %1497 = vmatprep.subr.mxu0 0.0
        %1498 = vmatpush1.msra.mxu0 0.0
        %1499 = vmatprep.subr.mxu0 0.0
        %1500 = vmatpush1.msra.mxu0 0.0
        %1501 = vmatprep.subr.mxu0 0.0
        %1502 = vmatpush1.msra.mxu0 0.0
        %1503 = vmatprep.subr.mxu0 0.0
        %1504 = vmatpush1.msra.mxu0 0.0
        %1505 = vmatprep.subr.mxu0 0.0
        %1506 = vmatpush1.msra.mxu0 0.0
        %1507 = vmatprep.subr.mxu0 0.0
        %1508 = vmatpush1.msra.mxu0 0.0
        %1509 = vmatprep.subr.mxu0 0.0
        %1510 = vmatpush1.msra.mxu0 0.0
        %1511 = vmatprep.subr.mxu0 0.0
        %1512 = vmatpush1.msra.mxu0 0.0
        %1513 = vmatprep.subr.mxu0 0.0
        %1514 = vmatpush1.msra.mxu0 0.0
        %1515 = vmatprep.subr.mxu0 0.0
        %1516 = vmatpush1.msra.mxu0 0.0
        %1517 = vmatprep.subr.mxu0 0.0
        %1518 = vmatpush1.msra.mxu0 0.0
        %1519 = vmatprep.subr.mxu0 0.0
        %1520 = vmatpush1.msra.mxu0 0.0
        %1521 = vmatprep.subr.mxu0 0.0
        %1522 = vmatpush1.msra.mxu0 0.0
        %1523 = vmatprep.subr.mxu0 0.0
        %1524 = vmatpush1.msra.mxu0 0.0
        %1525 = vmatprep.subr.mxu0 0.0
        %1526 = vmatpush1.msra.mxu0 0.0
        %1527 = vmatprep.subr.mxu0 0.0
        %1528 = vmatpush1.msra.mxu0 0.0
        %1529 = vmatprep.subr.mxu0 0.0
        %1530 = vmatpush1.msra.mxu0 0.0
        %1531 = vmatprep.subr.mxu0 0.0
        %1532 = vmatpush1.msra.mxu0 0.0
        %1533 = vmatprep.subr.mxu0 0.0
        %1534 = vmatpush1.msra.mxu0 0.0
        %1535 = vmatprep.subr.mxu0 0.0
        %1536 = vmatpush1.msra.mxu0 0.0
        %1537 = vmatprep.subr.mxu0 0.0
        %1538 = vmatpush1.msra.mxu0 0.0
        %1539 = vmatprep.subr.mxu0 0.0
        %1540 = vmatpush1.msra.mxu0 0.0
        %1541 = vmatprep.subr.mxu0 0.0
        %1542 = vmatpush1.msra.mxu0 0.0
        %1543 = vmatprep.subr.mxu0 0.0
        %1544 = vmatpush1.msra.mxu0 0.0
        %1545 = vmatprep.subr.mxu0 0.0
        %1546 = vmatpush1.msra.mxu0 0.0
        %1547 = vmatprep.mubr.f32.mxu0 0.0
        %1548 = vmatmul.mubr.f32.gmra.mrb[0].mxu0 %v1481
        %v1549 = vpop.f32.mrb[0].mxu0
        %v1550 = vadd.f32 0.0, %v1549
        %v1551 = vpop.f32.mrb[0].mxu0
        %1552 = vdwg.mxu0
        %v1553 = vadd.f32 %v1308, %v1550
        %1554 = vrot.lane.b32.xlu0 %v828, 32
        %v1555 = vpop.permute.xlu0 %1554
        %1556 = vrot.lane.b32.xlu0 %v756, 32
        %v1557 = vpop.permute.xlu0 %1556
        %v1558 = vsel %vm829, %v1555, 0
        %v1560 = vsel %vm829, %v1557, 0
        %1562 = vmatprep.subr.mxu0 0.0
        %1563 = vmatpush1.xpose.msra.mxu0 %v1560
        %1564 = vmatprep.subr.mxu0 0.0
        %1565 = vmatpush1.xpose.msra.mxu0 0.0
        %1566 = vmatprep.subr.mxu0 0.0
        %1567 = vmatpush1.xpose.msra.mxu0 0.0
        %1568 = vmatprep.subr.mxu0 0.0
        %1569 = vmatpush1.xpose.msra.mxu0 0.0
        %1570 = vmatprep.subr.mxu0 0.0
        %1571 = vmatpush1.xpose.msra.mxu0 0.0
        %1572 = vmatprep.subr.mxu0 0.0
        %1573 = vmatpush1.xpose.msra.mxu0 0.0
        %1574 = vmatprep.subr.mxu0 0.0
        %1575 = vmatpush1.xpose.msra.mxu0 0.0
        %1576 = vmatprep.subr.mxu0 0.0
        %1577 = vmatpush1.xpose.msra.mxu0 0.0
        %1578 = vmatprep.subr.mxu0 0.0
        %1579 = vmatpush1.xpose.msra.mxu0 0.0
        %1580 = vmatprep.subr.mxu0 0.0
        %1581 = vmatpush1.xpose.msra.mxu0 0.0
        %1582 = vmatprep.subr.mxu0 0.0
        %1583 = vmatpush1.xpose.msra.mxu0 0.0
        %1584 = vmatprep.subr.mxu0 0.0
        %1585 = vmatpush1.xpose.msra.mxu0 0.0
        %1586 = vmatprep.subr.mxu0 0.0
        %1587 = vmatpush1.xpose.msra.mxu0 0.0
        %1588 = vmatprep.subr.mxu0 0.0
        %1589 = vmatpush1.xpose.msra.mxu0 0.0
        %1590 = vmatprep.subr.mxu0 0.0
        %1591 = vmatpush1.xpose.msra.mxu0 0.0
        %1592 = vmatprep.subr.mxu0 0.0
        %1593 = vmatpush1.xpose.msra.mxu0 0.0
        %1594 = vmatprep.subr.mxu0 0.0
        %1595 = vmatpush1.xpose.msra.mxu0 0.0
        %1596 = vmatprep.subr.mxu0 0.0
        %1597 = vmatpush1.xpose.msra.mxu0 0.0
        %1598 = vmatprep.subr.mxu0 0.0
        %1599 = vmatpush1.xpose.msra.mxu0 0.0
        %1600 = vmatprep.subr.mxu0 0.0
        %1601 = vmatpush1.xpose.msra.mxu0 0.0
        %1602 = vmatprep.subr.mxu0 0.0
        %1603 = vmatpush1.xpose.msra.mxu0 0.0
        %1604 = vmatprep.subr.mxu0 0.0
        %1605 = vmatpush1.xpose.msra.mxu0 0.0
        %1606 = vmatprep.subr.mxu0 0.0
        %1607 = vmatpush1.xpose.msra.mxu0 0.0
        %1608 = vmatprep.subr.mxu0 0.0
        %1609 = vmatpush1.xpose.msra.mxu0 0.0
        %1610 = vmatprep.subr.mxu0 0.0
        %1611 = vmatpush1.xpose.msra.mxu0 0.0
        %1612 = vmatprep.subr.mxu0 0.0
        %1613 = vmatpush1.xpose.msra.mxu0 0.0
        %1614 = vmatprep.subr.mxu0 0.0
        %1615 = vmatpush1.xpose.msra.mxu0 0.0
        %1616 = vmatprep.subr.mxu0 0.0
        %1617 = vmatpush1.xpose.msra.mxu0 0.0
        %1618 = vmatprep.subr.mxu0 0.0
        %1619 = vmatpush1.xpose.msra.mxu0 0.0
        %1620 = vmatprep.subr.mxu0 0.0
        %1621 = vmatpush1.xpose.msra.mxu0 0.0
        %1622 = vmatprep.subr.mxu0 0.0
        %1623 = vmatpush1.xpose.msra.mxu0 0.0
        %1624 = vmatprep.subr.mxu0 0.0
        %1625 = vmatpush1.xpose.msra.mxu0 0.0
        %1626 = vmatprep.mubr.f32.mxu0 0.0
        %1627 = vmatmul.mubr.f32.gmra.mrb[0].mxu0 %v1558
        %v1628 = vpop.f32.mrb[0].mxu0
        %v1629 = vadd.f32 0.0, %v1628
        %v1630 = vpop.f32.mrb[0].mxu0
        %1631 = vdwg.mxu0
        %v1632 = vsel %vm906, %v1629, -inf
        %1633 = vmax.xlane.f32.xlu0 %v1632
        %v1634 = vpop.xlane.xlu0 %1633
        %v1635 = vsub.f32 %v1629, %v1634
        %v1636 = vmul.f32 %v1635, 1.442695
        %v1637 = vpow.pop %v1636
        %v1638 = vsel %vm906, %v1637, 0.0
        %1639 = vadd.xlane.f32.xlu0 %v1638
        %v1640 = vpop.xlane.xlu0 %1639
        %v1641 = vrcp.pop %v1640
        %v1642 = vmul.f32 %v1637, %v1641
        %1643 = vrot.lane.b32.xlu0 %v825, 32
        %v1644 = vpop.permute.xlu0 %1643
        %v1647 = vsel %vm906, %v1642, 0
        %1649 = vmatprep.subr.mxu0 0.0
        %1650 = vmatpush1.msra.mxu0 %v1644
        %1651 = vmatprep.subr.mxu0 0.0
        %1652 = vmatpush1.msra.mxu0 0.0
        %1653 = vmatprep.subr.mxu0 0.0
        %1654 = vmatpush1.msra.mxu0 0.0
        %1655 = vmatprep.subr.mxu0 0.0
        %1656 = vmatpush1.msra.mxu0 0.0
        %1657 = vmatprep.subr.mxu0 0.0
        %1658 = vmatpush1.msra.mxu0 0.0
        %1659 = vmatprep.subr.mxu0 0.0
        %1660 = vmatpush1.msra.mxu0 0.0
        %1661 = vmatprep.subr.mxu0 0.0
        %1662 = vmatpush1.msra.mxu0 0.0
        %1663 = vmatprep.subr.mxu0 0.0
        %1664 = vmatpush1.msra.mxu0 0.0
        %1665 = vmatprep.subr.mxu0 0.0
        %1666 = vmatpush1.msra.mxu0 0.0
        %1667 = vmatprep.subr.mxu0 0.0
        %1668 = vmatpush1.msra.mxu0 0.0
        %1669 = vmatprep.subr.mxu0 0.0
        %1670 = vmatpush1.msra.mxu0 0.0
        %1671 = vmatprep.subr.mxu0 0.0
        %1672 = vmatpush1.msra.mxu0 0.0
        %1673 = vmatprep.subr.mxu0 0.0
        %1674 = vmatpush1.msra.mxu0 0.0
        %1675 = vmatprep.subr.mxu0 0.0
        %1676 = vmatpush1.msra.mxu0 0.0
        %1677 = vmatprep.subr.mxu0 0.0
        %1678 = vmatpush1.msra.mxu0 0.0
        %1679 = vmatprep.subr.mxu0 0.0
        %1680 = vmatpush1.msra.mxu0 0.0
        %1681 = vmatprep.subr.mxu0 0.0
        %1682 = vmatpush1.msra.mxu0 0.0
        %1683 = vmatprep.subr.mxu0 0.0
        %1684 = vmatpush1.msra.mxu0 0.0
        %1685 = vmatprep.subr.mxu0 0.0
        %1686 = vmatpush1.msra.mxu0 0.0
        %1687 = vmatprep.subr.mxu0 0.0
        %1688 = vmatpush1.msra.mxu0 0.0
        %1689 = vmatprep.subr.mxu0 0.0
        %1690 = vmatpush1.msra.mxu0 0.0
        %1691 = vmatprep.subr.mxu0 0.0
        %1692 = vmatpush1.msra.mxu0 0.0
        %1693 = vmatprep.subr.mxu0 0.0
        %1694 = vmatpush1.msra.mxu0 0.0
        %1695 = vmatprep.subr.mxu0 0.0
        %1696 = vmatpush1.msra.mxu0 0.0
        %1697 = vmatprep.subr.mxu0 0.0
        %1698 = vmatpush1.msra.mxu0 0.0
        %1699 = vmatprep.subr.mxu0 0.0
        %1700 = vmatpush1.msra.mxu0 0.0
        %1701 = vmatprep.subr.mxu0 0.0
        %1702 = vmatpush1.msra.mxu0 0.0
        %1703 = vmatprep.subr.mxu0 0.0
        %1704 = vmatpush1.msra.mxu0 0.0
        %1705 = vmatprep.subr.mxu0 0.0
        %1706 = vmatpush1.msra.mxu0 0.0
        %1707 = vmatprep.subr.mxu0 0.0
        %1708 = vmatpush1.msra.mxu0 0.0
        %1709 = vmatprep.subr.mxu0 0.0
        %1710 = vmatpush1.msra.mxu0 0.0
        %1711 = vmatprep.subr.mxu0 0.0
        %1712 = vmatpush1.msra.mxu0 0.0
        %1713 = vmatprep.mubr.f32.mxu0 0.0
        %1714 = vmatmul.mubr.f32.gmra.mrb[0].mxu0 %v1647
        %v1715 = vpop.f32.mrb[0].mxu0
        %v1716 = vadd.f32 0.0, %v1715
        %v1717 = vpop.f32.mrb[0].mxu0
        %1718 = vdwg.mxu0
        %v1719 = vld [vmem:[#allocation10 + $0x60] sm:$0xff]
        %v1720 = vld [vmem:[#allocation10 + $0x68] sm:$0xff]
        %v1721 = vld [vmem:[#allocation10 + $0x70] sm:$0xff]
        %v1722 = vld [vmem:[#allocation10 + $0x78] sm:$0xff]
        %v1724 = vsel %vm829, %v1716, 0
        %1726 = vmatprep.subr.mxu0 0.0
        %1727 = vmatpush1.msra.mxu0 %v1719
        %1728 = vmatprep.subr.mxu0 0.0
        %1729 = vmatpush1.msra.mxu0 %v1720
        %1730 = vmatprep.subr.mxu0 0.0
        %1731 = vmatpush1.msra.mxu0 %v1721
        %1732 = vmatprep.subr.mxu0 0.0
        %1733 = vmatpush1.msra.mxu0 %v1722
        %1734 = vmatprep.subr.mxu0 0.0
        %1735 = vmatpush1.msra.mxu0 0.0
        %1736 = vmatprep.subr.mxu0 0.0
        %1737 = vmatpush1.msra.mxu0 0.0
        %1738 = vmatprep.subr.mxu0 0.0
        %1739 = vmatpush1.msra.mxu0 0.0
        %1740 = vmatprep.subr.mxu0 0.0
        %1741 = vmatpush1.msra.mxu0 0.0
        %1742 = vmatprep.subr.mxu0 0.0
        %1743 = vmatpush1.msra.mxu0 0.0
        %1744 = vmatprep.subr.mxu0 0.0
        %1745 = vmatpush1.msra.mxu0 0.0
        %1746 = vmatprep.subr.mxu0 0.0
        %1747 = vmatpush1.msra.mxu0 0.0
        %1748 = vmatprep.subr.mxu0 0.0
        %1749 = vmatpush1.msra.mxu0 0.0
        %1750 = vmatprep.subr.mxu0 0.0
        %1751 = vmatpush1.msra.mxu0 0.0
        %1752 = vmatprep.subr.mxu0 0.0
        %1753 = vmatpush1.msra.mxu0 0.0
        %1754 = vmatprep.subr.mxu0 0.0
        %1755 = vmatpush1.msra.mxu0 0.0
        %1756 = vmatprep.subr.mxu0 0.0
        %1757 = vmatpush1.msra.mxu0 0.0
        %1758 = vmatprep.subr.mxu0 0.0
        %1759 = vmatpush1.msra.mxu0 0.0
        %1760 = vmatprep.subr.mxu0 0.0
        %1761 = vmatpush1.msra.mxu0 0.0
        %1762 = vmatprep.subr.mxu0 0.0
        %1763 = vmatpush1.msra.mxu0 0.0
        %1764 = vmatprep.subr.mxu0 0.0
        %1765 = vmatpush1.msra.mxu0 0.0
        %1766 = vmatprep.subr.mxu0 0.0
        %1767 = vmatpush1.msra.mxu0 0.0
        %1768 = vmatprep.subr.mxu0 0.0
        %1769 = vmatpush1.msra.mxu0 0.0
        %1770 = vmatprep.subr.mxu0 0.0
        %1771 = vmatpush1.msra.mxu0 0.0
        %1772 = vmatprep.subr.mxu0 0.0
        %1773 = vmatpush1.msra.mxu0 0.0
        %1774 = vmatprep.subr.mxu0 0.0
        %1775 = vmatpush1.msra.mxu0 0.0
        %1776 = vmatprep.subr.mxu0 0.0
        %1777 = vmatpush1.msra.mxu0 0.0
        %1778 = vmatprep.subr.mxu0 0.0
        %1779 = vmatpush1.msra.mxu0 0.0
        %1780 = vmatprep.subr.mxu0 0.0
        %1781 = vmatpush1.msra.mxu0 0.0
        %1782 = vmatprep.subr.mxu0 0.0
        %1783 = vmatpush1.msra.mxu0 0.0
        %1784 = vmatprep.subr.mxu0 0.0
        %1785 = vmatpush1.msra.mxu0 0.0
        %1786 = vmatprep.subr.mxu0 0.0
        %1787 = vmatpush1.msra.mxu0 0.0
        %1788 = vmatprep.subr.mxu0 0.0
        %1789 = vmatpush1.msra.mxu0 0.0
        %1790 = vmatprep.mubr.f32.mxu0 0.0
        %1791 = vmatmul.mubr.f32.gmra.mrb[0].mxu0 %v1724
        %v1792 = vpop.f32.mrb[0].mxu0
        %v1793 = vadd.f32 0.0, %v1792
        %v1794 = vpop.f32.mrb[0].mxu0
        %1795 = vdwg.mxu0
        %v1796 = vadd.f32 %v1553, %v1793
        %v1797 = vadd.f32 %v593, %v1796
        %v1798 = vld [vmem:[%s6] sm:$0x1]
        %v1800 = vlaneseq
        %v1801 = vshrl.u32 %v1800, 7
        %v1802 = vsub.s32 0, %v1801
        %v1803 = vrot.slane %v1798, %v1802
        %v1805 = vadd.f32 %v1797, %v1803
        %1806 = vadd.xlane.f32.xlu0 %v1805
        %v1807 = vpop.xlane.xlu0 %1806
        %v1808 = vmul.f32 %v1807, %v596
        %v1809 = vsub.f32 %v1805, %v1808
        %v1810 = vmul.f32 %v1809, %v1809
        %1811 = vadd.xlane.f32.xlu0 %v1810
        %v1812 = vpop.xlane.xlu0 %1811
        %v1813 = vmul.f32 %v1812, %v596
        %v1814 = vadd.f32 %v1813, 1e-05
        %v1815 = vrsqrt.pop %v1814
        %v1816 = vmul.f32 %v1809, %v1815
        %v1817 = vld [vmem:[%s7] sm:$0x1]
        %v1819 = vlaneseq
        %v1820 = vshrl.u32 %v1819, 7
        %v1821 = vsub.s32 0, %v1820
        %v1822 = vrot.slane %v1817, %v1821
        %v1824 = vmul.f32 %v1816, %v1822
        %v1825 = vld [vmem:[%s8] sm:$0x1]
        %v1827 = vlaneseq
        %v1828 = vshrl.u32 %v1827, 7
        %v1829 = vsub.s32 0, %v1828
        %v1830 = vrot.slane %v1825, %v1829
        %v1832 = vadd.f32 %v1824, %v1830
        %v1833 = vld [vmem:[#allocation11] sm:$0xff]
        %v1834 = vld [vmem:[#allocation11 + $0x8] sm:$0xff]
        %v1835 = vld [vmem:[#allocation11 + $0x10] sm:$0xff]
        %v1836 = vld [vmem:[#allocation11 + $0x18] sm:$0xff]
        %v1837 = vld [vmem:[#allocation11 + $0x20] sm:$0xff]
        %v1838 = vld [vmem:[#allocation11 + $0x28] sm:$0xff]
        %v1839 = vld [vmem:[#allocation11 + $0x30] sm:$0xff]
        %v1840 = vld [vmem:[#allocation11 + $0x38] sm:$0xff]
        %v1841 = vld [vmem:[#allocation11 + $0x40] sm:$0xff]
        %v1842 = vld [vmem:[#allocation11 + $0x48] sm:$0xff]
        %v1843 = vld [vmem:[#allocation11 + $0x50] sm:$0xff]
        %v1844 = vld [vmem:[#allocation11 + $0x58] sm:$0xff]
        %v1845 = vld [vmem:[#allocation11 + $0x60] sm:$0xff]
        %v1846 = vld [vmem:[#allocation11 + $0x68] sm:$0xff]
        %v1847 = vld [vmem:[#allocation11 + $0x70] sm:$0xff]
        %v1848 = vld [vmem:[#allocation11 + $0x78] sm:$0xff]
        %v1849 = vld [vmem:[#allocation11 + $0x80] sm:$0xff]
        %v1850 = vld [vmem:[#allocation11 + $0x88] sm:$0xff]
        %v1851 = vld [vmem:[#allocation11 + $0x90] sm:$0xff]
        %v1852 = vld [vmem:[#allocation11 + $0x98] sm:$0xff]
        %v1853 = vld [vmem:[#allocation11 + $0xa0] sm:$0xff]
        %v1854 = vld [vmem:[#allocation11 + $0xa8] sm:$0xff]
        %v1855 = vld [vmem:[#allocation11 + $0xb0] sm:$0xff]
        %v1856 = vld [vmem:[#allocation11 + $0xb8] sm:$0xff]
        %v1857 = vld [vmem:[#allocation11 + $0xc0] sm:$0xff]
        %v1858 = vld [vmem:[#allocation11 + $0xc8] sm:$0xff]
        %v1859 = vld [vmem:[#allocation11 + $0xd0] sm:$0xff]
        %v1860 = vld [vmem:[#allocation11 + $0xd8] sm:$0xff]
        %v1861 = vld [vmem:[#allocation11 + $0xe0] sm:$0xff]
        %v1862 = vld [vmem:[#allocation11 + $0xe8] sm:$0xff]
        %v1863 = vld [vmem:[#allocation11 + $0xf0] sm:$0xff]
        %v1864 = vld [vmem:[#allocation11 + $0xf8] sm:$0xff]
        %v1865 = vld [vmem:[#allocation11 + $0x100] sm:$0xff]
        %v1866 = vld [vmem:[#allocation11 + $0x108] sm:$0xff]
        %v1867 = vld [vmem:[#allocation11 + $0x110] sm:$0xff]
        %v1868 = vld [vmem:[#allocation11 + $0x118] sm:$0xff]
        %v1869 = vld [vmem:[#allocation11 + $0x120] sm:$0xff]
        %v1870 = vld [vmem:[#allocation11 + $0x128] sm:$0xff]
        %v1871 = vld [vmem:[#allocation11 + $0x130] sm:$0xff]
        %v1872 = vld [vmem:[#allocation11 + $0x138] sm:$0xff]
        %v1873 = vld [vmem:[#allocation11 + $0x140] sm:$0xff]
        %v1874 = vld [vmem:[#allocation11 + $0x148] sm:$0xff]
        %v1875 = vld [vmem:[#allocation11 + $0x150] sm:$0xff]
        %v1876 = vld [vmem:[#allocation11 + $0x158] sm:$0xff]
        %v1877 = vld [vmem:[#allocation11 + $0x160] sm:$0xff]
        %v1878 = vld [vmem:[#allocation11 + $0x168] sm:$0xff]
        %v1879 = vld [vmem:[#allocation11 + $0x170] sm:$0xff]
        %v1880 = vld [vmem:[#allocation11 + $0x178] sm:$0xff]
        %v1881 = vld [vmem:[#allocation11 + $0x180] sm:$0xff]
        %v1882 = vld [vmem:[#allocation11 + $0x188] sm:$0xff]
        %v1883 = vld [vmem:[#allocation11 + $0x190] sm:$0xff]
        %v1884 = vld [vmem:[#allocation11 + $0x198] sm:$0xff]
        %v1885 = vld [vmem:[#allocation11 + $0x1a0] sm:$0xff]
        %v1886 = vld [vmem:[#allocation11 + $0x1a8] sm:$0xff]
        %v1887 = vld [vmem:[#allocation11 + $0x1b0] sm:$0xff]
        %v1888 = vld [vmem:[#allocation11 + $0x1b8] sm:$0xff]
        %v1889 = vld [vmem:[#allocation11 + $0x1c0] sm:$0xff]
        %v1890 = vld [vmem:[#allocation11 + $0x1c8] sm:$0xff]
        %v1891 = vld [vmem:[#allocation11 + $0x1d0] sm:$0xff]
        %v1892 = vld [vmem:[#allocation11 + $0x1d8] sm:$0xff]
        %v1893 = vld [vmem:[#allocation11 + $0x1e0] sm:$0xff]
        %v1894 = vld [vmem:[#allocation11 + $0x1e8] sm:$0xff]
        %v1895 = vld [vmem:[#allocation11 + $0x1f0] sm:$0xff]
        %v1896 = vld [vmem:[#allocation11 + $0x1f8] sm:$0xff]
        %v1897 = vld [vmem:[%s10] sm:$0xf]
        %v1899 = vlaneseq
        %v1900 = vshrl.u32 %v1899, 7
        %v1901 = vsub.s32 0, %v1900
        %v1902 = vrot.slane %v1897, %v1901
        %v1903 = vlaneseq
        %v1904 = vshrl.u32 %v1903, 7
        %v1905 = vsub.s32 1, %v1904
        %v1906 = vrot.slane %v1897, %v1905
        %v1907 = vlaneseq
        %v1908 = vshrl.u32 %v1907, 7
        %v1909 = vsub.s32 2, %v1908
        %v1910 = vrot.slane %v1897, %v1909
        %v1911 = vlaneseq
        %v1912 = vshrl.u32 %v1911, 7
        %v1913 = vsub.s32 3, %v1912
        %v1914 = vrot.slane %v1897, %v1913
        %1919 = vmatprep.subr.mxu0 %v1834
        %1920 = vmatpush1.msra.mxu0 %v1833
        %1921 = vmatprep.subr.mxu0 %v1838
        %1922 = vmatpush1.msra.mxu0 %v1837
        %1923 = vmatprep.subr.mxu0 %v1842
        %1924 = vmatpush1.msra.mxu0 %v1841
        %1925 = vmatprep.subr.mxu0 %v1846
        %1926 = vmatpush1.msra.mxu0 %v1845
        %1927 = vmatprep.subr.mxu0 %v1850
        %1928 = vmatpush1.msra.mxu0 %v1849
        %1929 = vmatprep.subr.mxu0 %v1854
        %1930 = vmatpush1.msra.mxu0 %v1853
        %1931 = vmatprep.subr.mxu0 %v1858
        %1932 = vmatpush1.msra.mxu0 %v1857
        %1933 = vmatprep.subr.mxu0 %v1862
        %1934 = vmatpush1.msra.mxu0 %v1861
        %1935 = vmatprep.subr.mxu0 %v1866
        %1936 = vmatpush1.msra.mxu0 %v1865
        %1937 = vmatprep.subr.mxu0 %v1870
        %1938 = vmatpush1.msra.mxu0 %v1869
        %1939 = vmatprep.subr.mxu0 %v1874
        %1940 = vmatpush1.msra.mxu0 %v1873
        %1941 = vmatprep.subr.mxu0 %v1878
        %1942 = vmatpush1.msra.mxu0 %v1877
        %1943 = vmatprep.subr.mxu0 %v1882
        %1944 = vmatpush1.msra.mxu0 %v1881
        %1945 = vmatprep.subr.mxu0 %v1886
        %1946 = vmatpush1.msra.mxu0 %v1885
        %1947 = vmatprep.subr.mxu0 %v1890
        %1948 = vmatpush1.msra.mxu0 %v1889
        %1949 = vmatprep.subr.mxu0 %v1894
        %1950 = vmatpush1.msra.mxu0 %v1893
        %1951 = vmatprep.subr.mxu0 0.0
        %1952 = vmatpush1.msra.mxu0 0.0
        %1953 = vmatprep.subr.mxu0 0.0
        %1954 = vmatpush1.msra.mxu0 0.0
        %1955 = vmatprep.subr.mxu0 0.0
        %1956 = vmatpush1.msra.mxu0 0.0
        %1957 = vmatprep.subr.mxu0 0.0
        %1958 = vmatpush1.msra.mxu0 0.0
        %1959 = vmatprep.subr.mxu0 0.0
        %1960 = vmatpush1.msra.mxu0 0.0
        %1961 = vmatprep.subr.mxu0 0.0
        %1962 = vmatpush1.msra.mxu0 0.0
        %1963 = vmatprep.subr.mxu0 0.0
        %1964 = vmatpush1.msra.mxu0 0.0
        %1965 = vmatprep.subr.mxu0 0.0
        %1966 = vmatpush1.msra.mxu0 0.0
        %1967 = vmatprep.subr.mxu0 0.0
        %1968 = vmatpush1.msra.mxu0 0.0
        %1969 = vmatprep.subr.mxu0 0.0
        %1970 = vmatpush1.msra.mxu0 0.0
        %1971 = vmatprep.subr.mxu0 0.0
        %1972 = vmatpush1.msra.mxu0 0.0
        %1973 = vmatprep.subr.mxu0 0.0
        %1974 = vmatpush1.msra.mxu0 0.0
        %1975 = vmatprep.subr.mxu0 0.0
        %1976 = vmatpush1.msra.mxu0 0.0
        %1977 = vmatprep.subr.mxu0 0.0
        %1978 = vmatpush1.msra.mxu0 0.0
        %1979 = vmatprep.subr.mxu0 0.0
        %1980 = vmatpush1.msra.mxu0 0.0
        %1981 = vmatprep.subr.mxu0 0.0
        %1982 = vmatpush1.msra.mxu0 0.0
        %1983 = vmatprep.mubr.f32.mxu0 0.0
        %1984 = vmatmul.mubr.f32.gmra.mrb[0].mxu0 %v1832
        %v1985 = vpop.f32.mrb[0].mxu0
        %v1986 = vadd.f32 %v1902, %v1985
        %v1987 = vpop.f32.mrb[0].mxu0
        %v1988 = vadd.f32 %v1906, %v1987
        %1989 = vdwg.mxu0
        %1990 = vmatprep.subr.mxu0 %v1836
        %1991 = vmatpush1.msra.mxu0 %v1835
        %1992 = vmatprep.subr.mxu0 %v1840
        %1993 = vmatpush1.msra.mxu0 %v1839
        %1994 = vmatprep.subr.mxu0 %v1844
        %1995 = vmatpush1.msra.mxu0 %v1843
        %1996 = vmatprep.subr.mxu0 %v1848
        %1997 = vmatpush1.msra.mxu0 %v1847
        %1998 = vmatprep.subr.mxu0 %v1852
        %1999 = vmatpush1.msra.mxu0 %v1851
        %2000 = vmatprep.subr.mxu0 %v1856
        %2001 = vmatpush1.msra.mxu0 %v1855
        %2002 = vmatprep.subr.mxu0 %v1860
        %2003 = vmatpush1.msra.mxu0 %v1859
        %2004 = vmatprep.subr.mxu0 %v1864
        %2005 = vmatpush1.msra.mxu0 %v1863
        %2006 = vmatprep.subr.mxu0 %v1868
        %2007 = vmatpush1.msra.mxu0 %v1867
        %2008 = vmatprep.subr.mxu0 %v1872
        %2009 = vmatpush1.msra.mxu0 %v1871
        %2010 = vmatprep.subr.mxu0 %v1876
        %2011 = vmatpush1.msra.mxu0 %v1875
        %2012 = vmatprep.subr.mxu0 %v1880
        %2013 = vmatpush1.msra.mxu0 %v1879
        %2014 = vmatprep.subr.mxu0 %v1884
        %2015 = vmatpush1.msra.mxu0 %v1883
        %2016 = vmatprep.subr.mxu0 %v1888
        %2017 = vmatpush1.msra.mxu0 %v1887
        %2018 = vmatprep.subr.mxu0 %v1892
        %2019 = vmatpush1.msra.mxu0 %v1891
        %2020 = vmatprep.subr.mxu0 %v1896
        %2021 = vmatpush1.msra.mxu0 %v1895
        %2022 = vmatprep.subr.mxu0 0.0
        %2023 = vmatpush1.msra.mxu0 0.0
        %2024 = vmatprep.subr.mxu0 0.0
        %2025 = vmatpush1.msra.mxu0 0.0
        %2026 = vmatprep.subr.mxu0 0.0
        %2027 = vmatpush1.msra.mxu0 0.0
        %2028 = vmatprep.subr.mxu0 0.0
        %2029 = vmatpush1.msra.mxu0 0.0
        %2030 = vmatprep.subr.mxu0 0.0
        %2031 = vmatpush1.msra.mxu0 0.0
        %2032 = vmatprep.subr.mxu0 0.0
        %2033 = vmatpush1.msra.mxu0 0.0
        %2034 = vmatprep.subr.mxu0 0.0
        %2035 = vmatpush1.msra.mxu0 0.0
        %2036 = vmatprep.subr.mxu0 0.0
        %2037 = vmatpush1.msra.mxu0 0.0
        %2038 = vmatprep.subr.mxu0 0.0
        %2039 = vmatpush1.msra.mxu0 0.0
        %2040 = vmatprep.subr.mxu0 0.0
        %2041 = vmatpush1.msra.mxu0 0.0
        %2042 = vmatprep.subr.mxu0 0.0
        %2043 = vmatpush1.msra.mxu0 0.0
        %2044 = vmatprep.subr.mxu0 0.0
        %2045 = vmatpush1.msra.mxu0 0.0
        %2046 = vmatprep.subr.mxu0 0.0
        %2047 = vmatpush1.msra.mxu0 0.0
        %2048 = vmatprep.subr.mxu0 0.0
        %2049 = vmatpush1.msra.mxu0 0.0
        %2050 = vmatprep.subr.mxu0 0.0
        %2051 = vmatpush1.msra.mxu0 0.0
        %2052 = vmatprep.subr.mxu0 0.0
        %2053 = vmatpush1.msra.mxu0 0.0
        %2054 = vmatprep.mubr.f32.mxu0 0.0
        %2055 = vmatmul.mubr.f32.gmra.mrb[0].mxu0 %v1832
        %v2056 = vpop.f32.mrb[0].mxu0
        %v2057 = vadd.f32 %v1910, %v2056
        %v2058 = vpop.f32.mrb[0].mxu0
        %v2059 = vadd.f32 %v1914, %v2058
        %2060 = vdwg.mxu0
        %v2061 = vmul.f32 %v1986, -1.702
        %v2062 = vmul.f32 %v1988, -1.702
        %v2063 = vmul.f32 %v2057, -1.702
        %v2064 = vmul.f32 %v2059, -1.702
        %v2065 = vmul.f32 %v2061, 1.442695
        %v2066 = vpow.pop %v2065
        %v2067 = vmul.f32 %v2062, 1.442695
        %v2068 = vpow.pop %v2067
        %v2069 = vmul.f32 %v2063, 1.442695
        %v2070 = vpow.pop %v2069
        %v2071 = vmul.f32 %v2064, 1.442695
        %v2072 = vpow.pop %v2071
        %v2073 = vadd.f32 %v2066, 1.0
        %v2074 = vadd.f32 %v2068, 1.0
        %v2075 = vadd.f32 %v2070, 1.0
        %v2076 = vadd.f32 %v2072, 1.0
        %v2077 = vrcp.pop %v2073
        %v2078 = vmul.f32 1.0, %v2077
        %v2079 = vrcp.pop %v2074
        %v2080 = vmul.f32 1.0, %v2079
        %v2081 = vrcp.pop %v2075
        %v2082 = vmul.f32 1.0, %v2081
        %v2083 = vrcp.pop %v2076
        %v2084 = vmul.f32 1.0, %v2083
        %v2085 = vmul.f32 %v1986, %v2078
        %v2086 = vmul.f32 %v1988, %v2080
        %v2087 = vmul.f32 %v2057, %v2082
        %v2088 = vmul.f32 %v2059, %v2084
        %v2089 = vld [vmem:[#allocation13] sm:$0xff]
        %v2090 = vld [vmem:[#allocation13 + $0x8] sm:$0xff]
        %v2091 = vld [vmem:[#allocation13 + $0x10] sm:$0xff]
        %v2092 = vld [vmem:[#allocation13 + $0x18] sm:$0xff]
        %v2093 = vld [vmem:[#allocation13 + $0x20] sm:$0xff]
        %v2094 = vld [vmem:[#allocation13 + $0x28] sm:$0xff]
        %v2095 = vld [vmem:[#allocation13 + $0x30] sm:$0xff]
        %v2096 = vld [vmem:[#allocation13 + $0x38] sm:$0xff]
        %v2097 = vld [vmem:[#allocation13 + $0x40] sm:$0xff]
        %v2098 = vld [vmem:[#allocation13 + $0x48] sm:$0xff]
        %v2099 = vld [vmem:[#allocation13 + $0x50] sm:$0xff]
        %v2100 = vld [vmem:[#allocation13 + $0x58] sm:$0xff]
        %v2101 = vld [vmem:[#allocation13 + $0x60] sm:$0xff]
        %v2102 = vld [vmem:[#allocation13 + $0x68] sm:$0xff]
        %v2103 = vld [vmem:[#allocation13 + $0x70] sm:$0xff]
        %v2104 = vld [vmem:[#allocation13 + $0x78] sm:$0xff]
        %v2105 = vld [vmem:[#allocation13 + $0x80] sm:$0xff]
        %v2106 = vld [vmem:[#allocation13 + $0x88] sm:$0xff]
        %v2107 = vld [vmem:[#allocation13 + $0x90] sm:$0xff]
        %v2108 = vld [vmem:[#allocation13 + $0x98] sm:$0xff]
        %v2109 = vld [vmem:[#allocation13 + $0xa0] sm:$0xff]
        %v2110 = vld [vmem:[#allocation13 + $0xa8] sm:$0xff]
        %v2111 = vld [vmem:[#allocation13 + $0xb0] sm:$0xff]
        %v2112 = vld [vmem:[#allocation13 + $0xb8] sm:$0xff]
        %v2113 = vld [vmem:[#allocation13 + $0xc0] sm:$0xff]
        %v2114 = vld [vmem:[#allocation13 + $0xc8] sm:$0xff]
        %v2115 = vld [vmem:[#allocation13 + $0xd0] sm:$0xff]
        %v2116 = vld [vmem:[#allocation13 + $0xd8] sm:$0xff]
        %v2117 = vld [vmem:[#allocation13 + $0xe0] sm:$0xff]
        %v2118 = vld [vmem:[#allocation13 + $0xe8] sm:$0xff]
        %v2119 = vld [vmem:[#allocation13 + $0xf0] sm:$0xff]
        %v2120 = vld [vmem:[#allocation13 + $0xf8] sm:$0xff]
        %v2121 = vld [vmem:[#allocation13 + $0x100] sm:$0xff]
        %v2122 = vld [vmem:[#allocation13 + $0x108] sm:$0xff]
        %v2123 = vld [vmem:[#allocation13 + $0x110] sm:$0xff]
        %v2124 = vld [vmem:[#allocation13 + $0x118] sm:$0xff]
        %v2125 = vld [vmem:[#allocation13 + $0x120] sm:$0xff]
        %v2126 = vld [vmem:[#allocation13 + $0x128] sm:$0xff]
        %v2127 = vld [vmem:[#allocation13 + $0x130] sm:$0xff]
        %v2128 = vld [vmem:[#allocation13 + $0x138] sm:$0xff]
        %v2129 = vld [vmem:[#allocation13 + $0x140] sm:$0xff]
        %v2130 = vld [vmem:[#allocation13 + $0x148] sm:$0xff]
        %v2131 = vld [vmem:[#allocation13 + $0x150] sm:$0xff]
        %v2132 = vld [vmem:[#allocation13 + $0x158] sm:$0xff]
        %v2133 = vld [vmem:[#allocation13 + $0x160] sm:$0xff]
        %v2134 = vld [vmem:[#allocation13 + $0x168] sm:$0xff]
        %v2135 = vld [vmem:[#allocation13 + $0x170] sm:$0xff]
        %v2136 = vld [vmem:[#allocation13 + $0x178] sm:$0xff]
        %v2137 = vld [vmem:[#allocation13 + $0x180] sm:$0xff]
        %v2138 = vld [vmem:[#allocation13 + $0x188] sm:$0xff]
        %v2139 = vld [vmem:[#allocation13 + $0x190] sm:$0xff]
        %v2140 = vld [vmem:[#allocation13 + $0x198] sm:$0xff]
        %v2141 = vld [vmem:[#allocation13 + $0x1a0] sm:$0xff]
        %v2142 = vld [vmem:[#allocation13 + $0x1a8] sm:$0xff]
        %v2143 = vld [vmem:[#allocation13 + $0x1b0] sm:$0xff]
        %v2144 = vld [vmem:[#allocation13 + $0x1b8] sm:$0xff]
        %v2145 = vld [vmem:[#allocation13 + $0x1c0] sm:$0xff]
        %v2146 = vld [vmem:[#allocation13 + $0x1c8] sm:$0xff]
        %v2147 = vld [vmem:[#allocation13 + $0x1d0] sm:$0xff]
        %v2148 = vld [vmem:[#allocation13 + $0x1d8] sm:$0xff]
        %v2149 = vld [vmem:[#allocation13 + $0x1e0] sm:$0xff]
        %v2150 = vld [vmem:[#allocation13 + $0x1e8] sm:$0xff]
        %v2151 = vld [vmem:[#allocation13 + $0x1f0] sm:$0xff]
        %v2152 = vld [vmem:[#allocation13 + $0x1f8] sm:$0xff]
        %v2153 = vld [vmem:[%s12] sm:$0x1]
        %v2155 = vlaneseq
        %v2156 = vshrl.u32 %v2155, 7
        %v2157 = vsub.s32 0, %v2156
        %v2158 = vrot.slane %v2153, %v2157
        %2160 = vmatprep.subr.mxu0 0.0
        %2161 = vmatpush1.msra.mxu0 %v2089
        %2162 = vmatprep.subr.mxu0 0.0
        %2163 = vmatpush1.msra.mxu0 %v2090
        %2164 = vmatprep.subr.mxu0 0.0
        %2165 = vmatpush1.msra.mxu0 %v2091
        %2166 = vmatprep.subr.mxu0 0.0
        %2167 = vmatpush1.msra.mxu0 %v2092
        %2168 = vmatprep.subr.mxu0 0.0
        %2169 = vmatpush1.msra.mxu0 %v2093
        %2170 = vmatprep.subr.mxu0 0.0
        %2171 = vmatpush1.msra.mxu0 %v2094
        %2172 = vmatprep.subr.mxu0 0.0
        %2173 = vmatpush1.msra.mxu0 %v2095
        %2174 = vmatprep.subr.mxu0 0.0
        %2175 = vmatpush1.msra.mxu0 %v2096
        %2176 = vmatprep.subr.mxu0 0.0
        %2177 = vmatpush1.msra.mxu0 %v2097
        %2178 = vmatprep.subr.mxu0 0.0
        %2179 = vmatpush1.msra.mxu0 %v2098
        %2180 = vmatprep.subr.mxu0 0.0
        %2181 = vmatpush1.msra.mxu0 %v2099
        %2182 = vmatprep.subr.mxu0 0.0
        %2183 = vmatpush1.msra.mxu0 %v2100
        %2184 = vmatprep.subr.mxu0 0.0
        %2185 = vmatpush1.msra.mxu0 %v2101
        %2186 = vmatprep.subr.mxu0 0.0
        %2187 = vmatpush1.msra.mxu0 %v2102
        %2188 = vmatprep.subr.mxu0 0.0
        %2189 = vmatpush1.msra.mxu0 %v2103
        %2190 = vmatprep.subr.mxu0 0.0
        %2191 = vmatpush1.msra.mxu0 %v2104
        %2192 = vmatprep.subr.mxu0 0.0
        %2193 = vmatpush1.msra.mxu0 %v2105
        %2194 = vmatprep.subr.mxu0 0.0
        %2195 = vmatpush1.msra.mxu0 %v2106
        %2196 = vmatprep.subr.mxu0 0.0
        %2197 = vmatpush1.msra.mxu0 %v2107
        %2198 = vmatprep.subr.mxu0 0.0
        %2199 = vmatpush1.msra.mxu0 %v2108
        %2200 = vmatprep.subr.mxu0 0.0
        %2201 = vmatpush1.msra.mxu0 %v2109
        %2202 = vmatprep.subr.mxu0 0.0
        %2203 = vmatpush1.msra.mxu0 %v2110
        %2204 = vmatprep.subr.mxu0 0.0
        %2205 = vmatpush1.msra.mxu0 %v2111
        %2206 = vmatprep.subr.mxu0 0.0
        %2207 = vmatpush1.msra.mxu0 %v2112
        %2208 = vmatprep.subr.mxu0 0.0
        %2209 = vmatpush1.msra.mxu0 %v2113
        %2210 = vmatprep.subr.mxu0 0.0
        %2211 = vmatpush1.msra.mxu0 %v2114
        %2212 = vmatprep.subr.mxu0 0.0
        %2213 = vmatpush1.msra.mxu0 %v2115
        %2214 = vmatprep.subr.mxu0 0.0
        %2215 = vmatpush1.msra.mxu0 %v2116
        %2216 = vmatprep.subr.mxu0 0.0
        %2217 = vmatpush1.msra.mxu0 %v2117
        %2218 = vmatprep.subr.mxu0 0.0
        %2219 = vmatpush1.msra.mxu0 %v2118
        %2220 = vmatprep.subr.mxu0 0.0
        %2221 = vmatpush1.msra.mxu0 %v2119
        %2222 = vmatprep.subr.mxu0 0.0
        %2223 = vmatpush1.msra.mxu0 %v2120
        %2224 = vmatprep.mubr.f32.mxu0 %v2086
        %2225 = vmatmul.mubr.f32.gmra.mrb[0].mxu0 %v2085
        %v2226 = vpop.f32.mrb[0].mxu0
        %v2227 = vadd.f32 %v2158, %v2226
        %v2228 = vpop.f32.mrb[0].mxu0
        %2229 = vdwg.mxu0
        %2230 = vmatprep.subr.mxu0 0.0
        %2231 = vmatpush1.msra.mxu0 %v2121
        %2232 = vmatprep.subr.mxu0 0.0
        %2233 = vmatpush1.msra.mxu0 %v2122
        %2234 = vmatprep.subr.mxu0 0.0
        %2235 = vmatpush1.msra.mxu0 %v2123
        %2236 = vmatprep.subr.mxu0 0.0
        %2237 = vmatpush1.msra.mxu0 %v2124
        %2238 = vmatprep.subr.mxu0 0.0
        %2239 = vmatpush1.msra.mxu0 %v2125
        %2240 = vmatprep.subr.mxu0 0.0
        %2241 = vmatpush1.msra.mxu0 %v2126
        %2242 = vmatprep.subr.mxu0 0.0
        %2243 = vmatpush1.msra.mxu0 %v2127
        %2244 = vmatprep.subr.mxu0 0.0
        %2245 = vmatpush1.msra.mxu0 %v2128
        %2246 = vmatprep.subr.mxu0 0.0
        %2247 = vmatpush1.msra.mxu0 %v2129
        %2248 = vmatprep.subr.mxu0 0.0
        %2249 = vmatpush1.msra.mxu0 %v2130
        %2250 = vmatprep.subr.mxu0 0.0
        %2251 = vmatpush1.msra.mxu0 %v2131
        %2252 = vmatprep.subr.mxu0 0.0
        %2253 = vmatpush1.msra.mxu0 %v2132
        %2254 = vmatprep.subr.mxu0 0.0
        %2255 = vmatpush1.msra.mxu0 %v2133
        %2256 = vmatprep.subr.mxu0 0.0
        %2257 = vmatpush1.msra.mxu0 %v2134
        %2258 = vmatprep.subr.mxu0 0.0
        %2259 = vmatpush1.msra.mxu0 %v2135
        %2260 = vmatprep.subr.mxu0 0.0
        %2261 = vmatpush1.msra.mxu0 %v2136
        %2262 = vmatprep.subr.mxu0 0.0
        %2263 = vmatpush1.msra.mxu0 %v2137
        %2264 = vmatprep.subr.mxu0 0.0
        %2265 = vmatpush1.msra.mxu0 %v2138
        %2266 = vmatprep.subr.mxu0 0.0
        %2267 = vmatpush1.msra.mxu0 %v2139
        %2268 = vmatprep.subr.mxu0 0.0
        %2269 = vmatpush1.msra.mxu0 %v2140
        %2270 = vmatprep.subr.mxu0 0.0
        %2271 = vmatpush1.msra.mxu0 %v2141
        %2272 = vmatprep.subr.mxu0 0.0
        %2273 = vmatpush1.msra.mxu0 %v2142
        %2274 = vmatprep.subr.mxu0 0.0
        %2275 = vmatpush1.msra.mxu0 %v2143
        %2276 = vmatprep.subr.mxu0 0.0
        %2277 = vmatpush1.msra.mxu0 %v2144
        %2278 = vmatprep.subr.mxu0 0.0
        %2279 = vmatpush1.msra.mxu0 %v2145
        %2280 = vmatprep.subr.mxu0 0.0
        %2281 = vmatpush1.msra.mxu0 %v2146
        %2282 = vmatprep.subr.mxu0 0.0
        %2283 = vmatpush1.msra.mxu0 %v2147
        %2284 = vmatprep.subr.mxu0 0.0
        %2285 = vmatpush1.msra.mxu0 %v2148
        %2286 = vmatprep.subr.mxu0 0.0
        %2287 = vmatpush1.msra.mxu0 %v2149
        %2288 = vmatprep.subr.mxu0 0.0
        %2289 = vmatpush1.msra.mxu0 %v2150
        %2290 = vmatprep.subr.mxu0 0.0
        %2291 = vmatpush1.msra.mxu0 %v2151
        %2292 = vmatprep.subr.mxu0 0.0
        %2293 = vmatpush1.msra.mxu0 %v2152
        %2294 = vmatprep.mubr.f32.mxu0 %v2088
        %2295 = vmatmul.mubr.f32.gmra.mrb[0].mxu0 %v2087
        %v2296 = vpop.f32.mrb[0].mxu0
        %v2297 = vadd.f32 %v2227, %v2296
        %v2298 = vpop.f32.mrb[0].mxu0
        %2299 = vdwg.mxu0
        %v2300 = vadd.f32 %v1805, %v2297
        %2301 = vadd.xlane.f32.xlu0 %v2300
        %v2302 = vpop.xlane.xlu0 %2301
        %v2303 = vmul.f32 %v2302, %v596
        %v2304 = vsub.f32 %v2300, %v2303
        %v2305 = vmul.f32 %v2304, %v2304
        %2306 = vadd.xlane.f32.xlu0 %v2305
        %v2307 = vpop.xlane.xlu0 %2306
        %v2308 = vmul.f32 %v2307, %v596
        %v2309 = vadd.f32 %v2308, 1e-05
        %v2310 = vrsqrt.pop %v2309
        %v2311 = vmul.f32 %v2304, %v2310
        %v2312 = vld [vmem:[%s13] sm:$0x1]
        %v2314 = vlaneseq
        %v2315 = vshrl.u32 %v2314, 7
        %v2316 = vsub.s32 0, %v2315
        %v2317 = vrot.slane %v2312, %v2316
        %v2319 = vmul.f32 %v2311, %v2317
        %v2320 = vld [vmem:[%s14] sm:$0x1]
        %v2322 = vlaneseq
        %v2323 = vshrl.u32 %v2322, 7
        %v2324 = vsub.s32 0, %v2323
        %v2325 = vrot.slane %v2320, %v2324
        %v2327 = vadd.f32 %v2319, %v2325
        %2328 = vst [vmem:[%s592] sm:$0xff] %v2327
        %s2329 = sand.u32 %s363, 1
        %s2330 = scalar_lea.sflag [#allocation4], %s2329
        %s2331 = sand.u32 %s363, 1
        %s2332 = smul.addr %s2331, 8
        %s2333 = scalar_lea.vmem [#allocation14], %s2332
        // Predicated region
        $region109: #{tpu_custom_call.1} parent=79 // pred_check
          %p2334 = pneg %p373
        $region110: #{tpu_custom_call.1} parent=79 // pred_check_branch
          %2336 = sbr.rel (%p2334) target = $region112
        $region111: #{tpu_custom_call.1} parent=79 // pred_region
          %s2338 = ssub.s32 128, 128
          %2339 = vsyncadd %s2330, %s2338
          %s2340 = smul.addr %s35, 128
          %s2341 = scalar_lea.hbm %s15, %s2340
          %s2343 = sshll.u32 %s2333, 4
          %s2344 = int_to_ptr.vmem [resolvable:$true] %s2343
          %2346 = dma.vmem_to_hbm [thread:$0]  %s2344, 128, %s2341, %s2330
        $region112: #{tpu_custom_call.1} parent=79 // pred_fallthru
          _
      $region80: #{tpu_custom_call.1} parent=5 // pred_fallthru
        _
      %p2347 = scmp.le.s32.totalorder 2, %s30
      // Predicated region
      $region113: #{tpu_custom_call.1} parent=5 // pred_check
        %p2348 = pneg %p2347
      $region114: #{tpu_custom_call.1} parent=5 // pred_check_branch
        %2350 = sbr.rel (%p2348) target = $region116
      $region115: #{tpu_custom_call.1} parent=5 // pred_region
        %s2351 = ssub.s32 %s30, 2
        // Predicated region
        $region117: #{tpu_custom_call.1} parent=115 // pred_check
          %p2352 = pneg %p379
        $region118: #{tpu_custom_call.1} parent=115 // pred_check_branch
          %2354 = sbr.rel (%p2352) target = $region120
        $region119: #{tpu_custom_call.1} parent=115 // pred_region
          %s2355 = sand.u32 %s364, 1
          %s2356 = scalar_lea.sflag [#allocation4], %s2355
          %s2357 = sand.u32 %s364, 1
          %s2358 = smul.addr %s2357, 8
          %s2359 = scalar_lea.vmem [#allocation14], %s2358
          %2360 = dma.done %s2356, 128
        $region120: #{tpu_custom_call.1} parent=115 // pred_fallthru
          _
      $region116: #{tpu_custom_call.1} parent=5 // pred_fallthru
        _
    $region6: #{tpu_custom_call.1} parent=1 // loop_footer
      %s34 = sadd.s32 1, %s30
    $region7: #{tpu_custom_call.1} parent=1 // loop_footer_branch
      %29 = sbr.rel target = $region3
    $region8: #{tpu_custom_call.1} parent=1 // loop_exit
      _
    %2361 = vsyncpa [#allocation3], 1
    %s2362 = scalar_lea.sflag [#allocation3], 1
    %2363 = vsyncpa %s2362, 1
    %2364 = vsyncpa [#allocation6], 1
    %2365 = vsyncpa [#allocation9], 1
    %2366 = vsyncpa [#allocation12], 1
    %2367 = vsyncpa [#allocation4], 1
    %s2368 = scalar_lea.sflag [#allocation4], 1
    %2369 = vsyncpa %s2368, 1

</llo_original>
